<compile_context>
chip_gen: v5e
topology: v5e:2x2
jax: 0.10.0
libtpu: 0.0.40
codegen_flags: <defaults>
</compile_context>

<pallas_src>
import jax
import jax.numpy as jnp
from jax.experimental import pallas as pl
from jax.experimental.pallas import tpu as pltpu


def mlp_kernel(x_ref, w1_ref, b1_ref, w2_ref, b2_ref, w3_ref, b3_ref, o_ref):
    # Layer 1: bf16 x @ bf16 W1 -> f32 acc, bias + ReLU in f32.
    h1 = jnp.dot(x_ref[...], w1_ref[...], preferred_element_type=jnp.float32)
    h1 = jnp.maximum(h1 + b1_ref[...], 0.0)
    # (Dropout(0.5) -> identity in eval)

    # Layer 2: cast activation back to bf16 for the MXU, accumulate in f32.
    h2 = jnp.dot(h1.astype(w2_ref.dtype), w2_ref[...],
                 preferred_element_type=jnp.float32)
    h2 = jnp.maximum(h2 + b2_ref[...], 0.0)
    # (Dropout(0.3) -> identity in eval)

    # Layer 3: logits (lane-dense, padded N).
    logits = jnp.dot(h2.astype(w3_ref.dtype), w3_ref[...],
                     preferred_element_type=jnp.float32)
    o_ref[...] = (logits + b3_ref[...]).astype(o_ref.dtype)


def _round_up(x, m):
    return ((x + m - 1) // m) * m


def yolov8_classifier_forward(x, params, *, tile_b=128,
                              compute_dtype=jnp.bfloat16):
    """Fused 3-layer MLP forward. x: (B, input_dim) f32 -> (B, num_classes) f32."""
    w1, b1, w2, b2, w3, b3 = params
    B, input_dim = x.shape
    h1_dim = w1.shape[1]          # 512
    h2_dim = w2.shape[1]          # 256
    num_classes = w3.shape[1]

    # Pad K of layer 1 and N of layer 3 to lane width (128).
    k_pad = _round_up(input_dim, 128)
    n_pad = _round_up(num_classes, 128)

    # Effective batch tile: fill the MXU M dim, but never exceed the
    # sublane-rounded batch.  Batch is zero-padded to a multiple of the tile.
    tile_b_eff = min(tile_b, _round_up(B, 8))
    b_pad = _round_up(B, tile_b_eff)

    # Zero-padding keeps the math exact (padded K rows contribute 0).
    x_p = jnp.zeros((b_pad, k_pad), x.dtype).at[:B, :input_dim].set(x)
    w1_p = jnp.zeros((k_pad, h1_dim), w1.dtype).at[:input_dim, :].set(w1)
    w3_p = jnp.zeros((h2_dim, n_pad), w3.dtype).at[:, :num_classes].set(w3)
    b3_p = jnp.zeros((1, n_pad), b3.dtype).at[:, :num_classes].set(b3)

    # bf16 MXU operands; biases stay f32 (VPU path).
    x_p = x_p.astype(compute_dtype)
    w1_p = w1_p.astype(compute_dtype)
    w2_c = w2.astype(compute_dtype)
    w3_p = w3_p.astype(compute_dtype)
    b1_c = b1.astype(jnp.float32)
    b2_c = b2.astype(jnp.float32)
    b3_p = b3_p.astype(jnp.float32)

    grid = (b_pad // tile_b_eff,)

    # Weights / biases: full tensors with a constant index_map -> DMA'd once,
    # VMEM-resident across all batch-grid steps.
    def full(shape):
        return pl.BlockSpec(shape, lambda i: (0,) * len(shape))

    flops = 2 * b_pad * (k_pad * h1_dim + h1_dim * h2_dim + h2_dim * n_pad)
    bytes_accessed = (
        x_p.size * 2
        + (w1_p.size + w2_c.size + w3_p.size) * 2
        + (b1_c.size + b2_c.size + b3_p.size) * 4
        + b_pad * n_pad * 4
    )

    out_pad = pl.pallas_call(
        mlp_kernel,
        out_shape=jax.ShapeDtypeStruct((b_pad, n_pad), jnp.float32),
        grid_spec=pltpu.PrefetchScalarGridSpec(
            num_scalar_prefetch=0,
            grid=grid,
            in_specs=[
                pl.BlockSpec((tile_b_eff, k_pad), lambda i: (i, 0)),
                full((k_pad, h1_dim)),
                full((1, h1_dim)),
                full((h1_dim, h2_dim)),
                full((1, h2_dim)),
                full((h2_dim, n_pad)),
                full((1, n_pad)),
            ],
            out_specs=pl.BlockSpec((tile_b_eff, n_pad), lambda i: (i, 0)),
        ),
        compiler_params=pltpu.CompilerParams(
            dimension_semantics=("parallel",),
        ),
        cost_estimate=pl.CostEstimate(
            flops=flops, transcendentals=0, bytes_accessed=bytes_accessed
        ),
    )(x_p, w1_p, b1_c, w2_c, b2_c, w3_p, b3_p)

    # Strip batch / class padding.
    return out_pad[:B, :num_classes]


def init_params(key, input_dim, num_classes):
    """Deterministic init mimicking nn.Linear default (uniform +-1/sqrt(fan_in))."""
    dims = [(input_dim, 512), (512, 256), (256, num_classes)]
    params = []
    for fan_in, fan_out in dims:
        kw, kb, key = jax.random.split(key, 3)
        bound = 1.0 / jnp.sqrt(fan_in)
        w = jax.random.uniform(kw, (fan_in, fan_out), jnp.float32, -bound, bound)
        b = jax.random.uniform(kb, (1, fan_out), jnp.float32, -bound, bound)
        params += [w, b]
    return tuple(params)


def reference_forward(x, params, compute_dtype=jnp.bfloat16):
    """Pure-JAX reference with the same bf16-operand / f32-accumulate recipe."""
    w1, b1, w2, b2, w3, b3 = params
    h1 = jnp.dot(x.astype(compute_dtype), w1.astype(compute_dtype),
                 preferred_element_type=jnp.float32)
    h1 = jnp.maximum(h1 + b1, 0.0)
    h2 = jnp.dot(h1.astype(compute_dtype), w2.astype(compute_dtype),
                 preferred_element_type=jnp.float32)
    h2 = jnp.maximum(h2 + b2, 0.0)
    logits = jnp.dot(h2.astype(compute_dtype), w3.astype(compute_dtype),
                     preferred_element_type=jnp.float32)
    return logits + b3


if __name__ == "__main__":
    key = jax.random.PRNGKey(0)
    kx, kp = jax.random.split(key)

    batch = 200          # exercises batch padding (-> 256) and 2 grid steps
    input_dim = 64       # small stand-in for YOLOv8 feature dim (padded to 128)
    num_classes = 10     # padded to 128 lane-dense output, sliced back

    x = jax.random.normal(kx, (batch, input_dim), jnp.float32)
    params = init_params(kp, input_dim, num_classes)

    out = yolov8_classifier_forward(x, params, tile_b=128)
    out = jax.block_until_ready(out)

    ref = reference_forward(x, params)
    assert out.shape == (batch, num_classes), out.shape
    assert jnp.allclose(out, ref, atol=2e-3, rtol=2e-3), (
        "mismatch vs reference: max abs diff = "
        f"{float(jnp.max(jnp.abs(out - ref)))}"
    )

    print("KERNEL_OK")
</pallas_src>

<mosaic_0001>
module attributes {stable_mosaic.version = 11 : i64} {
  func.func @mlp_kernel(%arg0: i32, %arg1: memref<128x128xbf16, #tpu.memory_space<vmem>>, %arg2: memref<128x512xbf16, #tpu.memory_space<vmem>>, %arg3: memref<1x512xf32, #tpu.memory_space<vmem>>, %arg4: memref<512x256xbf16, #tpu.memory_space<vmem>>, %arg5: memref<1x256xf32, #tpu.memory_space<vmem>>, %arg6: memref<256x128xbf16, #tpu.memory_space<vmem>>, %arg7: memref<1x128xf32, #tpu.memory_space<vmem>>, %arg8: memref<128x128xf32, #tpu.memory_space<vmem>>) attributes {dimension_semantics = [#tpu.dimension_semantics<parallel>], iteration_bounds = array<i64: 2>, scalar_prefetch = 0 : i64, scratch_operands = 0 : i64, tpu.core_type = #tpu.core_type<tc>, window_params = [{transform_indices = @transform_0, window_bounds = array<i64: 128, 128>}, {pipeline_mode = #tpu.pipeline_mode<synchronous>, transform_indices = @transform_1, window_bounds = array<i64: 128, 512>}, {pipeline_mode = #tpu.pipeline_mode<synchronous>, transform_indices = @transform_2, window_bounds = array<i64: 1, 512>}, {pipeline_mode = #tpu.pipeline_mode<synchronous>, transform_indices = @transform_3, window_bounds = array<i64: 512, 256>}, {pipeline_mode = #tpu.pipeline_mode<synchronous>, transform_indices = @transform_4, window_bounds = array<i64: 1, 256>}, {pipeline_mode = #tpu.pipeline_mode<synchronous>, transform_indices = @transform_5, window_bounds = array<i64: 256, 128>}, {pipeline_mode = #tpu.pipeline_mode<synchronous>, transform_indices = @transform_6, window_bounds = array<i64: 1, 128>}, {transform_indices = @transform_7, window_bounds = array<i64: 128, 128>}]} {
    %c0 = arith.constant 0 : index
    %c0_0 = arith.constant 0 : index
    %0 = vector.load %arg1[%c0, %c0_0] : memref<128x128xbf16, #tpu.memory_space<vmem>>, vector<128x128xbf16>
    %c0_1 = arith.constant 0 : index
    %c0_2 = arith.constant 0 : index
    %1 = vector.load %arg2[%c0_1, %c0_2] : memref<128x512xbf16, #tpu.memory_space<vmem>>, vector<128x512xbf16>
    %cst = arith.constant dense<0.000000e+00> : vector<128x512xf32>
    %2 = tpu.matmul %0, %1, %cst {dimension_numbers = #tpu.dot_dimension_numbers<[1], [0], [0], [1], [0, 0, 1, 1], [], []>} : vector<128x128xbf16>, vector<128x512xbf16>, vector<128x512xf32> -> vector<128x512xf32>
    %c0_3 = arith.constant 0 : index
    %c0_4 = arith.constant 0 : index
    %3 = vector.load %arg3[%c0_3, %c0_4] : memref<1x512xf32, #tpu.memory_space<vmem>>, vector<1x512xf32>
    %4 = vector.broadcast %3 : vector<1x512xf32> to vector<128x512xf32>
    %5 = arith.addf %2, %4 : vector<128x512xf32>
    %cst_5 = arith.constant 0.000000e+00 : f32
    %6 = vector.broadcast %cst_5 : f32 to vector<128x512xf32>
    %7 = arith.maximumf %5, %6 : vector<128x512xf32>
    %8 = arith.truncf %7 : vector<128x512xf32> to vector<128x512xbf16>
    %c0_6 = arith.constant 0 : index
    %c0_7 = arith.constant 0 : index
    %9 = vector.load %arg4[%c0_6, %c0_7] : memref<512x256xbf16, #tpu.memory_space<vmem>>, vector<512x256xbf16>
    %cst_8 = arith.constant dense<0.000000e+00> : vector<128x256xf32>
    %10 = tpu.matmul %8, %9, %cst_8 {dimension_numbers = #tpu.dot_dimension_numbers<[1], [0], [0], [1], [0, 0, 1, 1], [], []>} : vector<128x512xbf16>, vector<512x256xbf16>, vector<128x256xf32> -> vector<128x256xf32>
    %c0_9 = arith.constant 0 : index
    %c0_10 = arith.constant 0 : index
    %11 = vector.load %arg5[%c0_9, %c0_10] : memref<1x256xf32, #tpu.memory_space<vmem>>, vector<1x256xf32>
    %12 = vector.broadcast %11 : vector<1x256xf32> to vector<128x256xf32>
    %13 = arith.addf %10, %12 : vector<128x256xf32>
    %cst_11 = arith.constant 0.000000e+00 : f32
    %14 = vector.broadcast %cst_11 : f32 to vector<128x256xf32>
    %15 = arith.maximumf %13, %14 : vector<128x256xf32>
    %16 = arith.truncf %15 : vector<128x256xf32> to vector<128x256xbf16>
    %c0_12 = arith.constant 0 : index
    %c0_13 = arith.constant 0 : index
    %17 = vector.load %arg6[%c0_12, %c0_13] : memref<256x128xbf16, #tpu.memory_space<vmem>>, vector<256x128xbf16>
    %cst_14 = arith.constant dense<0.000000e+00> : vector<128x128xf32>
    %18 = tpu.matmul %16, %17, %cst_14 {dimension_numbers = #tpu.dot_dimension_numbers<[1], [0], [0], [1], [0, 0, 1, 1], [], []>} : vector<128x256xbf16>, vector<256x128xbf16>, vector<128x128xf32> -> vector<128x128xf32>
    %c0_15 = arith.constant 0 : index
    %c0_16 = arith.constant 0 : index
    %19 = vector.load %arg7[%c0_15, %c0_16] : memref<1x128xf32, #tpu.memory_space<vmem>>, vector<1x128xf32>
    %20 = vector.broadcast %19 : vector<1x128xf32> to vector<128x128xf32>
    %21 = arith.addf %18, %20 : vector<128x128xf32>
    %c0_17 = arith.constant 0 : index
    %c0_18 = arith.constant 0 : index
    %22 = vector.load %arg8[%c0_17, %c0_18] : memref<128x128xf32, #tpu.memory_space<vmem>>, vector<128x128xf32>
    tpu.vector_store %arg8[%c0_17, %c0_18], %21 {strides = array<i32>} : memref<128x128xf32, #tpu.memory_space<vmem>>, vector<128x128xf32>,
    return
  }
  func.func @transform_0(%arg0: i32) -> (i32, i32) {
    %c0_i32 = arith.constant 0 : i32
    %c0_i32_0 = arith.constant 0 : i32
    return %arg0, %c0_i32 : i32, i32
  }
  func.func @transform_1(%arg0: i32) -> (i32, i32) {
    %c0_i32 = arith.constant 0 : i32
    %c0_i32_0 = arith.constant 0 : i32
    %c0_i32_1 = arith.constant 0 : i32
    return %c0_i32, %c0_i32_0 : i32, i32
  }
  func.func @transform_2(%arg0: i32) -> (i32, i32) {
    %c0_i32 = arith.constant 0 : i32
    %c0_i32_0 = arith.constant 0 : i32
    %c0_i32_1 = arith.constant 0 : i32
    return %c0_i32, %c0_i32_0 : i32, i32
  }
  func.func @transform_3(%arg0: i32) -> (i32, i32) {
    %c0_i32 = arith.constant 0 : i32
    %c0_i32_0 = arith.constant 0 : i32
    %c0_i32_1 = arith.constant 0 : i32
    return %c0_i32, %c0_i32_0 : i32, i32
  }
  func.func @transform_4(%arg0: i32) -> (i32, i32) {
    %c0_i32 = arith.constant 0 : i32
    %c0_i32_0 = arith.constant 0 : i32
    %c0_i32_1 = arith.constant 0 : i32
    return %c0_i32, %c0_i32_0 : i32, i32
  }
  func.func @transform_5(%arg0: i32) -> (i32, i32) {
    %c0_i32 = arith.constant 0 : i32
    %c0_i32_0 = arith.constant 0 : i32
    %c0_i32_1 = arith.constant 0 : i32
    return %c0_i32, %c0_i32_0 : i32, i32
  }
  func.func @transform_6(%arg0: i32) -> (i32, i32) {
    %c0_i32 = arith.constant 0 : i32
    %c0_i32_0 = arith.constant 0 : i32
    %c0_i32_1 = arith.constant 0 : i32
    return %c0_i32, %c0_i32_0 : i32, i32
  }
  func.func @transform_7(%arg0: i32) -> (i32, i32) {
    %c0_i32 = arith.constant 0 : i32
    %c0_i32_0 = arith.constant 0 : i32
    return %arg0, %c0_i32 : i32, i32
  }
}

</mosaic_0001>

<llo_original>
// kernel: tpu_custom_call.1
$region0: #{tpu_custom_call.1}
  #allocation0 [shape = 'u32[]', space=smem, size = 0x4, offset = 0x4, fixed_abs, tag = 'smem constant byte address 0x4 - core index']
  #allocation1 [shape = 'u32[72,128]{1,0:T(1,128)}', space=vmem, size = 0x9000, scoped, tag = 'internal scratch']
  %s0 = inlined_call_operand.hbm [shape: bf16[256,128], index: 0, kind: input, shape index: {}]
  %s1 = inlined_call_operand.hbm [shape: bf16[128,512], index: 1, kind: input, shape index: {}]
  %s2 = inlined_call_operand.hbm [shape: f32[1,512], index: 2, kind: input, shape index: {}]
  %s3 = inlined_call_operand.hbm [shape: bf16[512,256], index: 3, kind: input, shape index: {}]
  %s4 = inlined_call_operand.vmem [shape: f32[1,256], index: 4, kind: input, shape index: {}]
  %s5 = inlined_call_operand.hbm [shape: bf16[256,128], index: 5, kind: input, shape index: {}]
  %s6 = inlined_call_operand.vmem [shape: f32[1,128], index: 6, kind: input, shape index: {}]
  %s7 = inlined_call_operand.hbm [shape: f32[256,128], index: 7, kind: output, shape index: {}]
  %s8 = sld [smem:[#allocation0]]
  $region81: #{tpu_custom_call.1} parent=0
    _
  %s10 = ssub.s32 1, %s8
  %s11 = scalar_select 0, %s10, %s8
  $region1: #{tpu_custom_call.1} parent=0
    #allocation2 [shape = 'u8[65536]{0}', space=vmem, size = 0x10000, scoped, tag = 'input window, operand 0']
    #allocation3 [shape = 's32[2]{0}', space=sflag, size = 0x8, scoped, tag = 'scoped memory for tpu_custom_call.1']
    #allocation4 [shape = 's32[2]{0}', space=sflag, size = 0x8, scoped, tag = 'scoped memory for tpu_custom_call.1']
    #allocation5 [shape = 'u8[131072]{0}', space=vmem, size = 0x20000, scoped, tag = 'input window, operand 1, single buffered']
    #allocation6 [shape = 's32[1]{0}', space=sflag, size = 0x4, scoped, tag = 'scoped memory for tpu_custom_call.1']
    #allocation7 [shape = 'u8[2048]{0}', space=vmem, size = 0x800, scoped, tag = 'input window, operand 2, single buffered']
    #allocation8 [shape = 'u8[262144]{0}', space=vmem, size = 0x40000, scoped, tag = 'input window, operand 3, single buffered']
    #allocation9 [shape = 's32[1]{0}', space=sflag, size = 0x4, scoped, tag = 'scoped memory for tpu_custom_call.1']
    #allocation10 [shape = 'u8[65536]{0}', space=vmem, size = 0x10000, scoped, tag = 'input window, operand 5, single buffered']
    #allocation11 [shape = 'u8[131072]{0}', space=vmem, size = 0x20000, scoped, tag = 'output window, operand 0']
    %12 = vsyncpa [#allocation3], 0
    %s13 = scalar_lea.sflag [#allocation3], 1
    %14 = vsyncpa %s13, 0
    %15 = vsyncpa [#allocation6], 0
    %16 = vsyncpa [#allocation9], 0
    %17 = vsyncpa [#allocation4], 0
    %s18 = scalar_lea.sflag [#allocation4], 1
    %19 = vsyncpa %s18, 0
    loop: start=0, step=1, limit=4
    $region2: #{tpu_custom_call.1} parent=1 // loop_pre_header
      _
    $region3: #{tpu_custom_call.1} parent=1 // loop_header
      %s21 = sphi 0, %s25
      %p22 = scmp.ge.s32.totalorder %s21, 4
      %s31 = sphi 0, %s33
      %s34 = sphi 0, %s31
      %s35 = sphi 0, %s34
      %s51 = sphi 0, %s35
      %s55 = sphi 0, %s55
      %s57 = sphi 0, %s55
      %s58 = sphi 0, %s57
      %s72 = sphi 0, %s58
      %s76 = sphi 0, %s76
      %s78 = sphi 0, %s76
      %s79 = sphi 0, %s78
      %s93 = sphi 0, %s79
      %s97 = sphi 0, %s97
      %s99 = sphi 0, %s97
      %s100 = sphi 0, %s99
      %s114 = sphi 0, %s100
      %s118 = sphi 0, %s118
      %s120 = sphi 0, %s118
      %s121 = sphi 0, %s120
      %s135 = sphi 0, %s121
      %s139 = sphi 0, %s139
      %s141 = sphi 0, %s139
      %s142 = sphi 0, %s141
      %s156 = sphi 0, %s142
      %s160 = sphi 0, %s160
      %s162 = sphi 0, %s160
      %s163 = sphi 0, %s162
      %s177 = sphi 0, %s163
      %s183 = sphi 0, %s185
      %s186 = sphi 0, %s183
      %s187 = sphi 0, %s186
      %s203 = sphi 0, %s187
    $region4: #{tpu_custom_call.1} parent=1 // loop_header_branch
      %24 = sbr.rel (%p22) target = $region8
    $region5: #{tpu_custom_call.1} parent=1 // loop_body
      %s26 = ssub.s32 %s21, 1
      %s27 = ssub.s32 %s21, 2
      %s28 = sadd.s32 %s21, 1
      %s29 = ssub.s32 %s21, %s28
      %p30 = scmp.eq.s32.totalorder %s29, 0
      %s32 = sadd.s32 %s31, 1
      %s33 = scalar_select %p30, %s31, %s32
      %p36 = pneg %p30
      %p37 = scmp.eq.s32.totalorder %s21, 1
      %p38 = por %p36, %p37
      %p39 = scmp.ne.s32.totalorder %s31, %s34
      %p40 = scmp.eq.s32.totalorder %s21, 0
      %p41 = por %p39, %p40
      %p42 = scmp.ne.s32.totalorder %s31, %s34
      %p43 = scmp.eq.s32.totalorder %s26, 1
      %p44 = por %p42, %p43
      %p45 = scmp.ne.s32.totalorder %s34, %s35
      %p46 = scmp.eq.s32.totalorder %s26, 0
      %p47 = por %p45, %p46
      %p48 = scmp.ne.s32.totalorder %s34, %s35
      %p49 = scmp.eq.s32.totalorder %s27, 1
      %p50 = por %p48, %p49
      %p52 = scmp.ne.s32.totalorder %s35, %s51
      %p53 = scmp.eq.s32.totalorder %s27, 0
      %p54 = por %p52, %p53
      %s56 = sadd.s32 %s55, 1
      %p59 = scmp.eq.s32.totalorder %s21, 1
      %p60 = scmp.ne.s32.totalorder %s55, %s57
      %p61 = scmp.eq.s32.totalorder %s21, 0
      %p62 = por %p60, %p61
      %p63 = scmp.ne.s32.totalorder %s55, %s57
      %p64 = scmp.eq.s32.totalorder %s26, 1
      %p65 = por %p63, %p64
      %p66 = scmp.ne.s32.totalorder %s57, %s58
      %p67 = scmp.eq.s32.totalorder %s26, 0
      %p68 = por %p66, %p67
      %p69 = scmp.ne.s32.totalorder %s57, %s58
      %p70 = scmp.eq.s32.totalorder %s27, 1
      %p71 = por %p69, %p70
      %p73 = scmp.ne.s32.totalorder %s58, %s72
      %p74 = scmp.eq.s32.totalorder %s27, 0
      %p75 = por %p73, %p74
      %s77 = sadd.s32 %s76, 1
      %p80 = scmp.eq.s32.totalorder %s21, 1
      %p81 = scmp.ne.s32.totalorder %s76, %s78
      %p82 = scmp.eq.s32.totalorder %s21, 0
      %p83 = por %p81, %p82
      %p84 = scmp.ne.s32.totalorder %s76, %s78
      %p85 = scmp.eq.s32.totalorder %s26, 1
      %p86 = por %p84, %p85
      %p87 = scmp.ne.s32.totalorder %s78, %s79
      %p88 = scmp.eq.s32.totalorder %s26, 0
      %p89 = por %p87, %p88
      %p90 = scmp.ne.s32.totalorder %s78, %s79
      %p91 = scmp.eq.s32.totalorder %s27, 1
      %p92 = por %p90, %p91
      %p94 = scmp.ne.s32.totalorder %s79, %s93
      %p95 = scmp.eq.s32.totalorder %s27, 0
      %p96 = por %p94, %p95
      %s98 = sadd.s32 %s97, 1
      %p101 = scmp.eq.s32.totalorder %s21, 1
      %p102 = scmp.ne.s32.totalorder %s97, %s99
      %p103 = scmp.eq.s32.totalorder %s21, 0
      %p104 = por %p102, %p103
      %p105 = scmp.ne.s32.totalorder %s97, %s99
      %p106 = scmp.eq.s32.totalorder %s26, 1
      %p107 = por %p105, %p106
      %p108 = scmp.ne.s32.totalorder %s99, %s100
      %p109 = scmp.eq.s32.totalorder %s26, 0
      %p110 = por %p108, %p109
      %p111 = scmp.ne.s32.totalorder %s99, %s100
      %p112 = scmp.eq.s32.totalorder %s27, 1
      %p113 = por %p111, %p112
      %p115 = scmp.ne.s32.totalorder %s100, %s114
      %p116 = scmp.eq.s32.totalorder %s27, 0
      %p117 = por %p115, %p116
      %s119 = sadd.s32 %s118, 1
      %p122 = scmp.eq.s32.totalorder %s21, 1
      %p123 = scmp.ne.s32.totalorder %s118, %s120
      %p124 = scmp.eq.s32.totalorder %s21, 0
      %p125 = por %p123, %p124
      %p126 = scmp.ne.s32.totalorder %s118, %s120
      %p127 = scmp.eq.s32.totalorder %s26, 1
      %p128 = por %p126, %p127
      %p129 = scmp.ne.s32.totalorder %s120, %s121
      %p130 = scmp.eq.s32.totalorder %s26, 0
      %p131 = por %p129, %p130
      %p132 = scmp.ne.s32.totalorder %s120, %s121
      %p133 = scmp.eq.s32.totalorder %s27, 1
      %p134 = por %p132, %p133
      %p136 = scmp.ne.s32.totalorder %s121, %s135
      %p137 = scmp.eq.s32.totalorder %s27, 0
      %p138 = por %p136, %p137
      %s140 = sadd.s32 %s139, 1
      %p143 = scmp.eq.s32.totalorder %s21, 1
      %p144 = scmp.ne.s32.totalorder %s139, %s141
      %p145 = scmp.eq.s32.totalorder %s21, 0
      %p146 = por %p144, %p145
      %p147 = scmp.ne.s32.totalorder %s139, %s141
      %p148 = scmp.eq.s32.totalorder %s26, 1
      %p149 = por %p147, %p148
      %p150 = scmp.ne.s32.totalorder %s141, %s142
      %p151 = scmp.eq.s32.totalorder %s26, 0
      %p152 = por %p150, %p151
      %p153 = scmp.ne.s32.totalorder %s141, %s142
      %p154 = scmp.eq.s32.totalorder %s27, 1
      %p155 = por %p153, %p154
      %p157 = scmp.ne.s32.totalorder %s142, %s156
      %p158 = scmp.eq.s32.totalorder %s27, 0
      %p159 = por %p157, %p158
      %s161 = sadd.s32 %s160, 1
      %p164 = scmp.eq.s32.totalorder %s21, 1
      %p165 = scmp.ne.s32.totalorder %s160, %s162
      %p166 = scmp.eq.s32.totalorder %s21, 0
      %p167 = por %p165, %p166
      %p168 = scmp.ne.s32.totalorder %s160, %s162
      %p169 = scmp.eq.s32.totalorder %s26, 1
      %p170 = por %p168, %p169
      %p171 = scmp.ne.s32.totalorder %s162, %s163
      %p172 = scmp.eq.s32.totalorder %s26, 0
      %p173 = por %p171, %p172
      %p174 = scmp.ne.s32.totalorder %s162, %s163
      %p175 = scmp.eq.s32.totalorder %s27, 1
      %p176 = por %p174, %p175
      %p178 = scmp.ne.s32.totalorder %s163, %s177
      %p179 = scmp.eq.s32.totalorder %s27, 0
      %p180 = por %p178, %p179
      %s181 = ssub.s32 %s21, %s28
      %p182 = scmp.eq.s32.totalorder %s181, 0
      %s184 = sadd.s32 %s183, 1
      %s185 = scalar_select %p182, %s183, %s184
      %p188 = pneg %p182
      %p189 = scmp.eq.s32.totalorder %s21, 1
      %p190 = por %p188, %p189
      %p191 = scmp.ne.s32.totalorder %s183, %s186
      %p192 = scmp.eq.s32.totalorder %s21, 0
      %p193 = por %p191, %p192
      %p194 = scmp.ne.s32.totalorder %s183, %s186
      %p195 = scmp.eq.s32.totalorder %s26, 1
      %p196 = por %p194, %p195
      %p197 = scmp.ne.s32.totalorder %s186, %s187
      %p198 = scmp.eq.s32.totalorder %s26, 0
      %p199 = por %p197, %p198
      %p200 = scmp.ne.s32.totalorder %s186, %s187
      %p201 = scmp.eq.s32.totalorder %s27, 1
      %p202 = por %p200, %p201
      %p204 = scmp.ne.s32.totalorder %s187, %s203
      %p205 = scmp.eq.s32.totalorder %s27, 0
      %p206 = por %p204, %p205
      %p207 = scmp.le.s32.totalorder 1, %s21
      %p208 = scmp.lt.s32.totalorder %s21, 3
      %p209 = pnand %p207, %p208
      %p210 = pneg %p209
      // Predicated region
      $region9: #{tpu_custom_call.1} parent=5 // pred_check
        _
      $region10: #{tpu_custom_call.1} parent=5 // pred_check_branch
        %212 = sbr.rel (%p209) target = $region12
      $region11: #{tpu_custom_call.1} parent=5 // pred_region
        %s213 = ssub.s32 %s21, 1
        // Predicated region
        $region13: #{tpu_custom_call.1} parent=11 // pred_check
          %p214 = pneg %p68
        $region14: #{tpu_custom_call.1} parent=11 // pred_check_branch
          %216 = sbr.rel (%p214) target = $region16
        $region15: #{tpu_custom_call.1} parent=11 // pred_region
          %218 = vsyncadd [#allocation6], 0
          %s219 = sshll.u32 %s1, 4
          %s220 = int_to_ptr.hbm [resolvable:$true] %s219
          %s221 = sshll.u32 [#allocation5], 4
          %s222 = int_to_ptr.vmem [resolvable:$true] %s221
          %227 = dma.hbm_to_vmem [thread:$0]  %s220, 4096, %s222, [#allocation6], 256, 256, 16
        $region16: #{tpu_custom_call.1} parent=11 // pred_fallthru
          _
        // Predicated region
        $region17: #{tpu_custom_call.1} parent=11 // pred_check
          %p228 = pneg %p89
        $region18: #{tpu_custom_call.1} parent=11 // pred_check_branch
          %230 = sbr.rel (%p228) target = $region20
        $region19: #{tpu_custom_call.1} parent=11 // pred_region
          %232 = vsyncadd [#allocation6], 0
          %s234 = sshll.u32 %s2, 4
          %s235 = int_to_ptr.hbm [resolvable:$true] %s234
          %s236 = sshll.u32 [#allocation7], 4
          %s237 = int_to_ptr.vmem [resolvable:$true] %s236
          %239 = dma.hbm_to_vmem [thread:$0]  %s235, 64, %s237, [#allocation6]
        $region20: #{tpu_custom_call.1} parent=11 // pred_fallthru
          _
        // Predicated region
        $region21: #{tpu_custom_call.1} parent=11 // pred_check
          %p240 = pneg %p110
        $region22: #{tpu_custom_call.1} parent=11 // pred_check_branch
          %242 = sbr.rel (%p240) target = $region24
        $region23: #{tpu_custom_call.1} parent=11 // pred_region
          %244 = vsyncadd [#allocation9], 0
          %s245 = sshll.u32 %s3, 4
          %s246 = int_to_ptr.hbm [resolvable:$true] %s245
          %s247 = sshll.u32 [#allocation8], 4
          %s248 = int_to_ptr.vmem [resolvable:$true] %s247
          %253 = dma.hbm_to_vmem [thread:$0]  %s246, 8192, %s248, [#allocation9], 128, 128, 8
        $region24: #{tpu_custom_call.1} parent=11 // pred_fallthru
          _
        // Predicated region
        $region25: #{tpu_custom_call.1} parent=11 // pred_check
          %p254 = pneg %p131
        $region26: #{tpu_custom_call.1} parent=11 // pred_check_branch
          %256 = sbr.rel (%p254) target = $region28
        $region27: #{tpu_custom_call.1} parent=11 // pred_region
          _
        $region28: #{tpu_custom_call.1} parent=11 // pred_fallthru
          _
        // Predicated region
        $region29: #{tpu_custom_call.1} parent=11 // pred_check
          %p257 = pneg %p152
        $region30: #{tpu_custom_call.1} parent=11 // pred_check_branch
          %259 = sbr.rel (%p257) target = $region32
        $region31: #{tpu_custom_call.1} parent=11 // pred_region
          %261 = vsyncadd [#allocation9], 0
          %s262 = sshll.u32 %s5, 4
          %s263 = int_to_ptr.hbm [resolvable:$true] %s262
          %s264 = sshll.u32 [#allocation10], 4
          %s265 = int_to_ptr.vmem [resolvable:$true] %s264
          %270 = dma.hbm_to_vmem [thread:$0]  %s263, 2048, %s265, [#allocation9], 64, 64, 4
        $region32: #{tpu_custom_call.1} parent=11 // pred_fallthru
          _
        // Predicated region
        $region33: #{tpu_custom_call.1} parent=11 // pred_check
          %p271 = pneg %p173
        $region34: #{tpu_custom_call.1} parent=11 // pred_check_branch
          %273 = sbr.rel (%p271) target = $region36
        $region35: #{tpu_custom_call.1} parent=11 // pred_region
          _
        $region36: #{tpu_custom_call.1} parent=11 // pred_fallthru
          _
      $region12: #{tpu_custom_call.1} parent=5 // pred_fallthru
        _
      %p274 = scmp.lt.s32.totalorder %s21, 2
      // Predicated region
      $region37: #{tpu_custom_call.1} parent=5 // pred_check
        %p275 = pneg %p274
      $region38: #{tpu_custom_call.1} parent=5 // pred_check_branch
        %277 = sbr.rel (%p275) target = $region40
      $region39: #{tpu_custom_call.1} parent=5 // pred_region
        // Predicated region
        $region41: #{tpu_custom_call.1} parent=39 // pred_check
          %p278 = pneg %p41
        $region42: #{tpu_custom_call.1} parent=39 // pred_check_branch
          %280 = sbr.rel (%p278) target = $region44
        $region43: #{tpu_custom_call.1} parent=39 // pred_region
          %s281 = sand.u32 %s31, 1
          %s282 = scalar_lea.sflag [#allocation3], %s281
          %s283 = sand.u32 %s31, 1
          %s284 = smul.addr %s283, 64
          %s285 = scalar_lea.vmem [#allocation2], %s284
          %s286 = smul.u32 16, %s21
          %288 = vsyncadd %s282, 0
          %s289 = smul.addr %s286, 4
          %s290 = scalar_lea.hbm %s0, %s289
          %s291 = sshll.u32 %s290, 4
          %s292 = int_to_ptr.hbm [resolvable:$true] %s291
          %s293 = sshll.u32 %s285, 4
          %s294 = int_to_ptr.vmem [resolvable:$true] %s293
          %299 = dma.hbm_to_vmem [thread:$0]  %s292, 1024, %s294, %s282, 64, 64, 4
        $region44: #{tpu_custom_call.1} parent=39 // pred_fallthru
          _
      $region40: #{tpu_custom_call.1} parent=5 // pred_fallthru
        _
      %p300 = scmp.le.s32.totalorder 1, %s21
      %p301 = scmp.lt.s32.totalorder %s21, 3
      %p302 = pnand %p300, %p301
      %p303 = pneg %p302
      // Predicated region
      $region45: #{tpu_custom_call.1} parent=5 // pred_check
        _
      $region46: #{tpu_custom_call.1} parent=5 // pred_check_branch
        %305 = sbr.rel (%p302) target = $region48
      $region47: #{tpu_custom_call.1} parent=5 // pred_region
        %s306 = ssub.s32 %s21, 1
        %s307 = sand.u32 %s34, 1
        %s308 = scalar_lea.sflag [#allocation3], %s307
        %s309 = sand.u32 %s34, 1
        %s310 = smul.addr %s309, 64
        %s311 = scalar_lea.vmem [#allocation2], %s310
        // Predicated region
        $region49: #{tpu_custom_call.1} parent=47 // pred_check
          %p312 = pneg %p47
        $region50: #{tpu_custom_call.1} parent=47 // pred_check_branch
          %314 = sbr.rel (%p312) target = $region52
        $region51: #{tpu_custom_call.1} parent=47 // pred_region
          %316 = dma.done %s308, 1024
        $region52: #{tpu_custom_call.1} parent=47 // pred_fallthru
          _
        // Predicated region
        $region53: #{tpu_custom_call.1} parent=47 // pred_check
          %p317 = pneg %p68
        $region54: #{tpu_custom_call.1} parent=47 // pred_check_branch
          %319 = sbr.rel (%p317) target = $region56
        $region55: #{tpu_custom_call.1} parent=47 // pred_region
          %321 = dma.done [#allocation6], 4096
        $region56: #{tpu_custom_call.1} parent=47 // pred_fallthru
          _
        // Predicated region
        $region57: #{tpu_custom_call.1} parent=47 // pred_check
          %p322 = pneg %p89
        $region58: #{tpu_custom_call.1} parent=47 // pred_check_branch
          %324 = sbr.rel (%p322) target = $region60
        $region59: #{tpu_custom_call.1} parent=47 // pred_region
          %326 = dma.done [#allocation6], 64
        $region60: #{tpu_custom_call.1} parent=47 // pred_fallthru
          _
        // Predicated region
        $region61: #{tpu_custom_call.1} parent=47 // pred_check
          %p327 = pneg %p110
        $region62: #{tpu_custom_call.1} parent=47 // pred_check_branch
          %329 = sbr.rel (%p327) target = $region64
        $region63: #{tpu_custom_call.1} parent=47 // pred_region
          %331 = dma.done [#allocation9], 8192
        $region64: #{tpu_custom_call.1} parent=47 // pred_fallthru
          _
        // Predicated region
        $region65: #{tpu_custom_call.1} parent=47 // pred_check
          %p332 = pneg %p152
        $region66: #{tpu_custom_call.1} parent=47 // pred_check_branch
          %334 = sbr.rel (%p332) target = $region68
        $region67: #{tpu_custom_call.1} parent=47 // pred_region
          %336 = dma.done [#allocation9], 2048
        $region68: #{tpu_custom_call.1} parent=47 // pred_fallthru
          _
        %s337 = sand.u32 %s34, 1
        %s338 = scalar_lea.sflag [#allocation3], %s337
        %s339 = sand.u32 %s34, 1
        %s340 = smul.addr %s339, 64
        %s341 = scalar_lea.vmem [#allocation2], %s340
        %p342 = pneg %p47
        %p343 = pneg %p44
        %p344 = pneg %p68
        %p345 = pneg %p65
        %p346 = pneg %p89
        %p347 = pneg %p86
        %p348 = pneg %p110
        %p349 = pneg %p107
        %p350 = pneg %p131
        %p351 = pneg %p128
        %p352 = pneg %p152
        %p353 = pneg %p149
        %p354 = pneg %p173
        %p355 = pneg %p170
        %p356 = pneg %p199
        %p357 = pneg %p196
        %s358 = sand.u32 %s186, 1
        %s359 = scalar_lea.sflag [#allocation4], %s358
        %s360 = sand.u32 %s186, 1
        %s361 = smul.addr %s360, 128
        %s362 = scalar_lea.vmem [#allocation11], %s361
        %s363 = smul.u32 16, %s26
        %s364 = smul.u32 16, %s26
        %v365 = vld [vmem:[%s311] sm:$0xf]
        %v366 = vld [vmem:[%s311 + $0x4] sm:$0xf]
        %v367 = vld [vmem:[%s311 + $0x8] sm:$0xf]
        %v368 = vld [vmem:[%s311 + $0xc] sm:$0xf]
        %v369 = vld [vmem:[%s311 + $0x10] sm:$0xf]
        %v370 = vld [vmem:[%s311 + $0x14] sm:$0xf]
        %v371 = vld [vmem:[%s311 + $0x18] sm:$0xf]
        %v372 = vld [vmem:[%s311 + $0x1c] sm:$0xf]
        %v373 = vld [vmem:[%s311 + $0x20] sm:$0xf]
        %v374 = vld [vmem:[%s311 + $0x24] sm:$0xf]
        %v375 = vld [vmem:[%s311 + $0x28] sm:$0xf]
        %v376 = vld [vmem:[%s311 + $0x2c] sm:$0xf]
        %v377 = vld [vmem:[%s311 + $0x30] sm:$0xf]
        %v378 = vld [vmem:[%s311 + $0x34] sm:$0xf]
        %v379 = vld [vmem:[%s311 + $0x38] sm:$0xf]
        %v380 = vld [vmem:[%s311 + $0x3c] sm:$0xf]
        %v381 = vld [vmem:[#allocation5] sm:$0xff]
        %v382 = vld [vmem:[#allocation5 + $0x8] sm:$0xff]
        %v383 = vld [vmem:[#allocation5 + $0x10] sm:$0xff]
        %v384 = vld [vmem:[#allocation5 + $0x18] sm:$0xff]
        %v385 = vld [vmem:[#allocation5 + $0x20] sm:$0xff]
        %v386 = vld [vmem:[#allocation5 + $0x28] sm:$0xff]
        %v387 = vld [vmem:[#allocation5 + $0x30] sm:$0xff]
        %v388 = vld [vmem:[#allocation5 + $0x38] sm:$0xff]
        %v389 = vld [vmem:[#allocation5 + $0x40] sm:$0xff]
        %v390 = vld [vmem:[#allocation5 + $0x48] sm:$0xff]
        %v391 = vld [vmem:[#allocation5 + $0x50] sm:$0xff]
        %v392 = vld [vmem:[#allocation5 + $0x58] sm:$0xff]
        %v393 = vld [vmem:[#allocation5 + $0x60] sm:$0xff]
        %v394 = vld [vmem:[#allocation5 + $0x68] sm:$0xff]
        %v395 = vld [vmem:[#allocation5 + $0x70] sm:$0xff]
        %v396 = vld [vmem:[#allocation5 + $0x78] sm:$0xff]
        %v397 = vld [vmem:[#allocation5 + $0x80] sm:$0xff]
        %v398 = vld [vmem:[#allocation5 + $0x88] sm:$0xff]
        %v399 = vld [vmem:[#allocation5 + $0x90] sm:$0xff]
        %v400 = vld [vmem:[#allocation5 + $0x98] sm:$0xff]
        %v401 = vld [vmem:[#allocation5 + $0xa0] sm:$0xff]
        %v402 = vld [vmem:[#allocation5 + $0xa8] sm:$0xff]
        %v403 = vld [vmem:[#allocation5 + $0xb0] sm:$0xff]
        %v404 = vld [vmem:[#allocation5 + $0xb8] sm:$0xff]
        %v405 = vld [vmem:[#allocation5 + $0xc0] sm:$0xff]
        %v406 = vld [vmem:[#allocation5 + $0xc8] sm:$0xff]
        %v407 = vld [vmem:[#allocation5 + $0xd0] sm:$0xff]
        %v408 = vld [vmem:[#allocation5 + $0xd8] sm:$0xff]
        %v409 = vld [vmem:[#allocation5 + $0xe0] sm:$0xff]
        %v410 = vld [vmem:[#allocation5 + $0xe8] sm:$0xff]
        %v411 = vld [vmem:[#allocation5 + $0xf0] sm:$0xff]
        %v412 = vld [vmem:[#allocation5 + $0xf8] sm:$0xff]
        %v413 = vld [vmem:[#allocation7] sm:$0xf]
        %v415 = vperm.slane %v413, 0
        %v416 = vperm.slane %v413, 1
        %v417 = vperm.slane %v413, 2
        %v418 = vperm.slane %v413, 3
        %v439 = vunpack.c.l.b16 %v365
        %v440 = vunpack.c.l.b16 %v366
        %v441 = vunpack.c.l.b16 %v367
        %v442 = vunpack.c.l.b16 %v368
        %v443 = vunpack.c.l.b16 %v369
        %v444 = vunpack.c.l.b16 %v370
        %v445 = vunpack.c.l.b16 %v371
        %v446 = vunpack.c.l.b16 %v372
        %v447 = vunpack.c.l.b16 %v373
        %v448 = vunpack.c.l.b16 %v374
        %v449 = vunpack.c.l.b16 %v375
        %v450 = vunpack.c.l.b16 %v376
        %v451 = vunpack.c.l.b16 %v377
        %v452 = vunpack.c.l.b16 %v378
        %v453 = vunpack.c.l.b16 %v379
        %v454 = vunpack.c.l.b16 %v380
        %v455 = vpack.c.b16 %v440, %v439
        %v456 = vpack.c.b16 %v442, %v441
        %v457 = vpack.c.b16 %v444, %v443
        %v458 = vpack.c.b16 %v446, %v445
        %v459 = vpack.c.b16 %v448, %v447
        %v460 = vpack.c.b16 %v450, %v449
        %v461 = vpack.c.b16 %v452, %v451
        %v462 = vpack.c.b16 %v454, %v453
        %v503 = vunpack.c.l.b16 %v381
        %v504 = vunpack.c.h.b16 %v381
        %v505 = vunpack.c.l.b16 %v382
        %v506 = vunpack.c.h.b16 %v382
        %v507 = vunpack.c.l.b16 %v383
        %v508 = vunpack.c.h.b16 %v383
        %v509 = vunpack.c.l.b16 %v384
        %v510 = vunpack.c.h.b16 %v384
        %v511 = vunpack.c.l.b16 %v385
        %v512 = vunpack.c.h.b16 %v385
        %v513 = vunpack.c.l.b16 %v386
        %v514 = vunpack.c.h.b16 %v386
        %v515 = vunpack.c.l.b16 %v387
        %v516 = vunpack.c.h.b16 %v387
        %v517 = vunpack.c.l.b16 %v388
        %v518 = vunpack.c.h.b16 %v388
        %v519 = vunpack.c.l.b16 %v389
        %v520 = vunpack.c.h.b16 %v389
        %v521 = vunpack.c.l.b16 %v390
        %v522 = vunpack.c.h.b16 %v390
        %v523 = vunpack.c.l.b16 %v391
        %v524 = vunpack.c.h.b16 %v391
        %v525 = vunpack.c.l.b16 %v392
        %v526 = vunpack.c.h.b16 %v392
        %v527 = vunpack.c.l.b16 %v393
        %v528 = vunpack.c.h.b16 %v393
        %v529 = vunpack.c.l.b16 %v394
        %v530 = vunpack.c.h.b16 %v394
        %v531 = vunpack.c.l.b16 %v395
        %v532 = vunpack.c.h.b16 %v395
        %v533 = vunpack.c.l.b16 %v396
        %v534 = vunpack.c.h.b16 %v396
        %v535 = vunpack.c.l.b16 %v397
        %v536 = vunpack.c.h.b16 %v397
        %v537 = vunpack.c.l.b16 %v398
        %v538 = vunpack.c.h.b16 %v398
        %v539 = vunpack.c.l.b16 %v399
        %v540 = vunpack.c.h.b16 %v399
        %v541 = vunpack.c.l.b16 %v400
        %v542 = vunpack.c.h.b16 %v400
        %v543 = vunpack.c.l.b16 %v401
        %v544 = vunpack.c.h.b16 %v401
        %v545 = vunpack.c.l.b16 %v402
        %v546 = vunpack.c.h.b16 %v402
        %v547 = vunpack.c.l.b16 %v403
        %v548 = vunpack.c.h.b16 %v403
        %v549 = vunpack.c.l.b16 %v404
        %v550 = vunpack.c.h.b16 %v404
        %v551 = vunpack.c.l.b16 %v405
        %v552 = vunpack.c.h.b16 %v405
        %v553 = vunpack.c.l.b16 %v406
        %v554 = vunpack.c.h.b16 %v406
        %v555 = vunpack.c.l.b16 %v407
        %v556 = vunpack.c.h.b16 %v407
        %v557 = vunpack.c.l.b16 %v408
        %v558 = vunpack.c.h.b16 %v408
        %v559 = vunpack.c.l.b16 %v409
        %v560 = vunpack.c.h.b16 %v409
        %v561 = vunpack.c.l.b16 %v410
        %v562 = vunpack.c.h.b16 %v410
        %v563 = vunpack.c.l.b16 %v411
        %v564 = vunpack.c.h.b16 %v411
        %v565 = vunpack.c.l.b16 %v412
        %v566 = vunpack.c.h.b16 %v412
        %v567 = vpack.c.b16 %v507, %v503
        %v568 = vpack.c.b16 %v508, %v504
        %v569 = vpack.c.b16 %v509, %v505
        %v570 = vpack.c.b16 %v510, %v506
        %v571 = vpack.c.b16 %v515, %v511
        %v572 = vpack.c.b16 %v516, %v512
        %v573 = vpack.c.b16 %v517, %v513
        %v574 = vpack.c.b16 %v518, %v514
        %v575 = vpack.c.b16 %v523, %v519
        %v576 = vpack.c.b16 %v524, %v520
        %v577 = vpack.c.b16 %v525, %v521
        %v578 = vpack.c.b16 %v526, %v522
        %v579 = vpack.c.b16 %v531, %v527
        %v580 = vpack.c.b16 %v532, %v528
        %v581 = vpack.c.b16 %v533, %v529
        %v582 = vpack.c.b16 %v534, %v530
        %v583 = vpack.c.b16 %v539, %v535
        %v584 = vpack.c.b16 %v540, %v536
        %v585 = vpack.c.b16 %v541, %v537
        %v586 = vpack.c.b16 %v542, %v538
        %v587 = vpack.c.b16 %v547, %v543
        %v588 = vpack.c.b16 %v548, %v544
        %v589 = vpack.c.b16 %v549, %v545
        %v590 = vpack.c.b16 %v550, %v546
        %v591 = vpack.c.b16 %v555, %v551
        %v592 = vpack.c.b16 %v556, %v552
        %v593 = vpack.c.b16 %v557, %v553
        %v594 = vpack.c.b16 %v558, %v554
        %v595 = vpack.c.b16 %v563, %v559
        %v596 = vpack.c.b16 %v564, %v560
        %v597 = vpack.c.b16 %v565, %v561
        %v598 = vpack.c.b16 %v566, %v562
        %631 = vmatpush.bf16.msra.mxu0 %v595
        %632 = vmatpush.bf16.msra.mxu0 %v591
        %633 = vmatpush.bf16.msra.mxu0 %v587
        %634 = vmatpush.bf16.msra.mxu0 %v583
        %635 = vmatpush.bf16.msra.mxu0 %v579
        %636 = vmatpush.bf16.msra.mxu0 %v575
        %637 = vmatpush.bf16.msra.mxu0 %v571
        %638 = vmatpush.bf16.msra.mxu0 %v567
        %639 = vmatmul.bf16.gmra.mxu0 %v455
        %v640 = vpop.f32.mrf.mxu0
        %v641 = vadd.f32 %v415, %v640
        %v642 = vpop.f32.mrf.mxu0
        %v643 = vadd.f32 %v415, %v642
        %644 = vmatmul.bf16.gmra.mxu0 %v456
        %v645 = vpop.f32.mrf.mxu0
        %v646 = vadd.f32 %v415, %v645
        %v647 = vpop.f32.mrf.mxu0
        %v648 = vadd.f32 %v415, %v647
        %649 = vmatmul.bf16.gmra.mxu0 %v457
        %v650 = vpop.f32.mrf.mxu0
        %v651 = vadd.f32 %v415, %v650
        %v652 = vpop.f32.mrf.mxu0
        %v653 = vadd.f32 %v415, %v652
        %654 = vmatmul.bf16.gmra.mxu0 %v458
        %v655 = vpop.f32.mrf.mxu0
        %v656 = vadd.f32 %v415, %v655
        %v657 = vpop.f32.mrf.mxu0
        %v658 = vadd.f32 %v415, %v657
        %659 = vmatmul.bf16.gmra.mxu0 %v459
        %v660 = vpop.f32.mrf.mxu0
        %v661 = vadd.f32 %v415, %v660
        %v662 = vpop.f32.mrf.mxu0
        %v663 = vadd.f32 %v415, %v662
        %664 = vmatmul.bf16.gmra.mxu0 %v460
        %v665 = vpop.f32.mrf.mxu0
        %v666 = vadd.f32 %v415, %v665
        %v667 = vpop.f32.mrf.mxu0
        %v668 = vadd.f32 %v415, %v667
        %669 = vmatmul.bf16.gmra.mxu0 %v461
        %v670 = vpop.f32.mrf.mxu0
        %v671 = vadd.f32 %v415, %v670
        %v672 = vpop.f32.mrf.mxu0
        %v673 = vadd.f32 %v415, %v672
        %674 = vmatmul.bf16.gmra.mxu0 %v462
        %v675 = vpop.f32.mrf.mxu0
        %v676 = vadd.f32 %v415, %v675
        %v677 = vpop.f32.mrf.mxu0
        %v678 = vadd.f32 %v415, %v677
        %679 = vdwg.mxu0
        %680 = vmatpush.bf16.msra.mxu0 %v596
        %681 = vmatpush.bf16.msra.mxu0 %v592
        %682 = vmatpush.bf16.msra.mxu0 %v588
        %683 = vmatpush.bf16.msra.mxu0 %v584
        %684 = vmatpush.bf16.msra.mxu0 %v580
        %685 = vmatpush.bf16.msra.mxu0 %v576
        %686 = vmatpush.bf16.msra.mxu0 %v572
        %687 = vmatpush.bf16.msra.mxu0 %v568
        %688 = vmatmul.bf16.gmra.mxu0 %v455
        %v689 = vpop.f32.mrf.mxu0
        %v690 = vadd.f32 %v416, %v689
        %v691 = vpop.f32.mrf.mxu0
        %v692 = vadd.f32 %v416, %v691
        %693 = vmatmul.bf16.gmra.mxu0 %v456
        %v694 = vpop.f32.mrf.mxu0
        %v695 = vadd.f32 %v416, %v694
        %v696 = vpop.f32.mrf.mxu0
        %v697 = vadd.f32 %v416, %v696
        %698 = vmatmul.bf16.gmra.mxu0 %v457
        %v699 = vpop.f32.mrf.mxu0
        %v700 = vadd.f32 %v416, %v699
        %v701 = vpop.f32.mrf.mxu0
        %v702 = vadd.f32 %v416, %v701
        %703 = vmatmul.bf16.gmra.mxu0 %v458
        %v704 = vpop.f32.mrf.mxu0
        %v705 = vadd.f32 %v416, %v704
        %v706 = vpop.f32.mrf.mxu0
        %v707 = vadd.f32 %v416, %v706
        %708 = vmatmul.bf16.gmra.mxu0 %v459
        %v709 = vpop.f32.mrf.mxu0
        %v710 = vadd.f32 %v416, %v709
        %v711 = vpop.f32.mrf.mxu0
        %v712 = vadd.f32 %v416, %v711
        %713 = vmatmul.bf16.gmra.mxu0 %v460
        %v714 = vpop.f32.mrf.mxu0
        %v715 = vadd.f32 %v416, %v714
        %v716 = vpop.f32.mrf.mxu0
        %v717 = vadd.f32 %v416, %v716
        %718 = vmatmul.bf16.gmra.mxu0 %v461
        %v719 = vpop.f32.mrf.mxu0
        %v720 = vadd.f32 %v416, %v719
        %v721 = vpop.f32.mrf.mxu0
        %v722 = vadd.f32 %v416, %v721
        %723 = vmatmul.bf16.gmra.mxu0 %v462
        %v724 = vpop.f32.mrf.mxu0
        %v725 = vadd.f32 %v416, %v724
        %v726 = vpop.f32.mrf.mxu0
        %v727 = vadd.f32 %v416, %v726
        %728 = vdwg.mxu0
        %729 = vmatpush.bf16.msra.mxu0 %v597
        %730 = vmatpush.bf16.msra.mxu0 %v593
        %731 = vmatpush.bf16.msra.mxu0 %v589
        %732 = vmatpush.bf16.msra.mxu0 %v585
        %733 = vmatpush.bf16.msra.mxu0 %v581
        %734 = vmatpush.bf16.msra.mxu0 %v577
        %735 = vmatpush.bf16.msra.mxu0 %v573
        %736 = vmatpush.bf16.msra.mxu0 %v569
        %737 = vmatmul.bf16.gmra.mxu0 %v455
        %v738 = vpop.f32.mrf.mxu0
        %v739 = vadd.f32 %v417, %v738
        %v740 = vpop.f32.mrf.mxu0
        %v741 = vadd.f32 %v417, %v740
        %742 = vmatmul.bf16.gmra.mxu0 %v456
        %v743 = vpop.f32.mrf.mxu0
        %v744 = vadd.f32 %v417, %v743
        %v745 = vpop.f32.mrf.mxu0
        %v746 = vadd.f32 %v417, %v745
        %747 = vmatmul.bf16.gmra.mxu0 %v457
        %v748 = vpop.f32.mrf.mxu0
        %v749 = vadd.f32 %v417, %v748
        %v750 = vpop.f32.mrf.mxu0
        %v751 = vadd.f32 %v417, %v750
        %752 = vmatmul.bf16.gmra.mxu0 %v458
        %v753 = vpop.f32.mrf.mxu0
        %v754 = vadd.f32 %v417, %v753
        %v755 = vpop.f32.mrf.mxu0
        %v756 = vadd.f32 %v417, %v755
        %757 = vmatmul.bf16.gmra.mxu0 %v459
        %v758 = vpop.f32.mrf.mxu0
        %v759 = vadd.f32 %v417, %v758
        %v760 = vpop.f32.mrf.mxu0
        %v761 = vadd.f32 %v417, %v760
        %762 = vmatmul.bf16.gmra.mxu0 %v460
        %v763 = vpop.f32.mrf.mxu0
        %v764 = vadd.f32 %v417, %v763
        %v765 = vpop.f32.mrf.mxu0
        %v766 = vadd.f32 %v417, %v765
        %767 = vmatmul.bf16.gmra.mxu0 %v461
        %v768 = vpop.f32.mrf.mxu0
        %v769 = vadd.f32 %v417, %v768
        %v770 = vpop.f32.mrf.mxu0
        %v771 = vadd.f32 %v417, %v770
        %772 = vmatmul.bf16.gmra.mxu0 %v462
        %v773 = vpop.f32.mrf.mxu0
        %v774 = vadd.f32 %v417, %v773
        %v775 = vpop.f32.mrf.mxu0
        %v776 = vadd.f32 %v417, %v775
        %777 = vdwg.mxu0
        %778 = vmatpush.bf16.msra.mxu0 %v598
        %779 = vmatpush.bf16.msra.mxu0 %v594
        %780 = vmatpush.bf16.msra.mxu0 %v590
        %781 = vmatpush.bf16.msra.mxu0 %v586
        %782 = vmatpush.bf16.msra.mxu0 %v582
        %783 = vmatpush.bf16.msra.mxu0 %v578
        %784 = vmatpush.bf16.msra.mxu0 %v574
        %785 = vmatpush.bf16.msra.mxu0 %v570
        %786 = vmatmul.bf16.gmra.mxu0 %v455
        %v787 = vpop.f32.mrf.mxu0
        %v788 = vadd.f32 %v418, %v787
        %v789 = vpop.f32.mrf.mxu0
        %v790 = vadd.f32 %v418, %v789
        %791 = vmatmul.bf16.gmra.mxu0 %v456
        %v792 = vpop.f32.mrf.mxu0
        %v793 = vadd.f32 %v418, %v792
        %v794 = vpop.f32.mrf.mxu0
        %v795 = vadd.f32 %v418, %v794
        %796 = vmatmul.bf16.gmra.mxu0 %v457
        %v797 = vpop.f32.mrf.mxu0
        %v798 = vadd.f32 %v418, %v797
        %v799 = vpop.f32.mrf.mxu0
        %v800 = vadd.f32 %v418, %v799
        %801 = vmatmul.bf16.gmra.mxu0 %v458
        %v802 = vpop.f32.mrf.mxu0
        %v803 = vadd.f32 %v418, %v802
        %v804 = vpop.f32.mrf.mxu0
        %v805 = vadd.f32 %v418, %v804
        %806 = vmatmul.bf16.gmra.mxu0 %v459
        %v807 = vpop.f32.mrf.mxu0
        %v808 = vadd.f32 %v418, %v807
        %v809 = vpop.f32.mrf.mxu0
        %v810 = vadd.f32 %v418, %v809
        %811 = vmatmul.bf16.gmra.mxu0 %v460
        %v812 = vpop.f32.mrf.mxu0
        %v813 = vadd.f32 %v418, %v812
        %v814 = vpop.f32.mrf.mxu0
        %v815 = vadd.f32 %v418, %v814
        %816 = vmatmul.bf16.gmra.mxu0 %v461
        %v817 = vpop.f32.mrf.mxu0
        %v818 = vadd.f32 %v418, %v817
        %v819 = vpop.f32.mrf.mxu0
        %v820 = vadd.f32 %v418, %v819
        %821 = vmatmul.bf16.gmra.mxu0 %v462
        %v822 = vpop.f32.mrf.mxu0
        %v823 = vadd.f32 %v418, %v822
        %v824 = vpop.f32.mrf.mxu0
        %v825 = vadd.f32 %v418, %v824
        %826 = vdwg.mxu0
        %v827 = vmax.f32 %v641, 0.0
        %v828 = vmax.f32 %v690, 0.0
        %v829 = vmax.f32 %v739, 0.0
        %v830 = vmax.f32 %v788, 0.0
        %v831 = vmax.f32 %v643, 0.0
        %v832 = vmax.f32 %v692, 0.0
        %v833 = vmax.f32 %v741, 0.0
        %v834 = vmax.f32 %v790, 0.0
        %v835 = vmax.f32 %v646, 0.0
        %v836 = vmax.f32 %v695, 0.0
        %v837 = vmax.f32 %v744, 0.0
        %v838 = vmax.f32 %v793, 0.0
        %v839 = vmax.f32 %v648, 0.0
        %v840 = vmax.f32 %v697, 0.0
        %v841 = vmax.f32 %v746, 0.0
        %v842 = vmax.f32 %v795, 0.0
        %v843 = vmax.f32 %v651, 0.0
        %v844 = vmax.f32 %v700, 0.0
        %v845 = vmax.f32 %v749, 0.0
        %v846 = vmax.f32 %v798, 0.0
        %v847 = vmax.f32 %v653, 0.0
        %v848 = vmax.f32 %v702, 0.0
        %v849 = vmax.f32 %v751, 0.0
        %v850 = vmax.f32 %v800, 0.0
        %v851 = vmax.f32 %v656, 0.0
        %v852 = vmax.f32 %v705, 0.0
        %v853 = vmax.f32 %v754, 0.0
        %v854 = vmax.f32 %v803, 0.0
        %v855 = vmax.f32 %v658, 0.0
        %v856 = vmax.f32 %v707, 0.0
        %v857 = vmax.f32 %v756, 0.0
        %v858 = vmax.f32 %v805, 0.0
        %v859 = vmax.f32 %v661, 0.0
        %v860 = vmax.f32 %v710, 0.0
        %v861 = vmax.f32 %v759, 0.0
        %v862 = vmax.f32 %v808, 0.0
        %v863 = vmax.f32 %v663, 0.0
        %v864 = vmax.f32 %v712, 0.0
        %v865 = vmax.f32 %v761, 0.0
        %v866 = vmax.f32 %v810, 0.0
        %v867 = vmax.f32 %v666, 0.0
        %v868 = vmax.f32 %v715, 0.0
        %v869 = vmax.f32 %v764, 0.0
        %v870 = vmax.f32 %v813, 0.0
        %v871 = vmax.f32 %v668, 0.0
        %v872 = vmax.f32 %v717, 0.0
        %v873 = vmax.f32 %v766, 0.0
        %v874 = vmax.f32 %v815, 0.0
        %v875 = vmax.f32 %v671, 0.0
        %v876 = vmax.f32 %v720, 0.0
        %v877 = vmax.f32 %v769, 0.0
        %v878 = vmax.f32 %v818, 0.0
        %v879 = vmax.f32 %v673, 0.0
        %v880 = vmax.f32 %v722, 0.0
        %v881 = vmax.f32 %v771, 0.0
        %v882 = vmax.f32 %v820, 0.0
        %v883 = vmax.f32 %v676, 0.0
        %v884 = vmax.f32 %v725, 0.0
        %v885 = vmax.f32 %v774, 0.0
        %v886 = vmax.f32 %v823, 0.0
        %v887 = vmax.f32 %v678, 0.0
        %v888 = vmax.f32 %v727, 0.0
        %v889 = vmax.f32 %v776, 0.0
        %v890 = vmax.f32 %v825, 0.0
        %v891 = vpack.c.bf16 %v831, %v827
        %v892 = vpack.c.bf16 %v832, %v828
        %v893 = vpack.c.bf16 %v833, %v829
        %v894 = vpack.c.bf16 %v834, %v830
        %v895 = vpack.c.bf16 %v839, %v835
        %v896 = vpack.c.bf16 %v840, %v836
        %v897 = vpack.c.bf16 %v841, %v837
        %v898 = vpack.c.bf16 %v842, %v838
        %v899 = vpack.c.bf16 %v847, %v843
        %v900 = vpack.c.bf16 %v848, %v844
        %v901 = vpack.c.bf16 %v849, %v845
        %v902 = vpack.c.bf16 %v850, %v846
        %v903 = vpack.c.bf16 %v855, %v851
        %v904 = vpack.c.bf16 %v856, %v852
        %v905 = vpack.c.bf16 %v857, %v853
        %v906 = vpack.c.bf16 %v858, %v854
        %v907 = vpack.c.bf16 %v863, %v859
        %v908 = vpack.c.bf16 %v864, %v860
        %v909 = vpack.c.bf16 %v865, %v861
        %v910 = vpack.c.bf16 %v866, %v862
        %v911 = vpack.c.bf16 %v871, %v867
        %v912 = vpack.c.bf16 %v872, %v868
        %v913 = vpack.c.bf16 %v873, %v869
        %v914 = vpack.c.bf16 %v874, %v870
        %v915 = vpack.c.bf16 %v879, %v875
        %v916 = vpack.c.bf16 %v880, %v876
        %v917 = vpack.c.bf16 %v881, %v877
        %v918 = vpack.c.bf16 %v882, %v878
        %v919 = vpack.c.bf16 %v887, %v883
        %v920 = vpack.c.bf16 %v888, %v884
        %v921 = vpack.c.bf16 %v889, %v885
        %v922 = vpack.c.bf16 %v890, %v886
        %v923 = vld [vmem:[#allocation8] sm:$0xff]
        %v924 = vld [vmem:[#allocation8 + $0x8] sm:$0xff]
        %v925 = vld [vmem:[#allocation8 + $0x10] sm:$0xff]
        %v926 = vld [vmem:[#allocation8 + $0x18] sm:$0xff]
        %v927 = vld [vmem:[#allocation8 + $0x20] sm:$0xff]
        %v928 = vld [vmem:[#allocation8 + $0x28] sm:$0xff]
        %v929 = vld [vmem:[#allocation8 + $0x30] sm:$0xff]
        %v930 = vld [vmem:[#allocation8 + $0x38] sm:$0xff]
        %v931 = vld [vmem:[#allocation8 + $0x40] sm:$0xff]
        %v932 = vld [vmem:[#allocation8 + $0x48] sm:$0xff]
        %v933 = vld [vmem:[#allocation8 + $0x50] sm:$0xff]
        %v934 = vld [vmem:[#allocation8 + $0x58] sm:$0xff]
        %v935 = vld [vmem:[#allocation8 + $0x60] sm:$0xff]
        %v936 = vld [vmem:[#allocation8 + $0x68] sm:$0xff]
        %v937 = vld [vmem:[#allocation8 + $0x70] sm:$0xff]
        %v938 = vld [vmem:[#allocation8 + $0x78] sm:$0xff]
        %v939 = vld [vmem:[#allocation8 + $0x80] sm:$0xff]
        %v940 = vld [vmem:[#allocation8 + $0x88] sm:$0xff]
        %v941 = vld [vmem:[#allocation8 + $0x90] sm:$0xff]
        %v942 = vld [vmem:[#allocation8 + $0x98] sm:$0xff]
        %v943 = vld [vmem:[#allocation8 + $0xa0] sm:$0xff]
        %v944 = vld [vmem:[#allocation8 + $0xa8] sm:$0xff]
        %v945 = vld [vmem:[#allocation8 + $0xb0] sm:$0xff]
        %v946 = vld [vmem:[#allocation8 + $0xb8] sm:$0xff]
        %v947 = vld [vmem:[#allocation8 + $0xc0] sm:$0xff]
        %v948 = vld [vmem:[#allocation8 + $0xc8] sm:$0xff]
        %v949 = vld [vmem:[#allocation8 + $0xd0] sm:$0xff]
        %v950 = vld [vmem:[#allocation8 + $0xd8] sm:$0xff]
        %v951 = vld [vmem:[#allocation8 + $0xe0] sm:$0xff]
        %v952 = vld [vmem:[#allocation8 + $0xe8] sm:$0xff]
        %v953 = vld [vmem:[#allocation8 + $0xf0] sm:$0xff]
        %v954 = vld [vmem:[#allocation8 + $0xf8] sm:$0xff]
        %v955 = vld [vmem:[#allocation8 + $0x100] sm:$0xff]
        %v956 = vld [vmem:[#allocation8 + $0x108] sm:$0xff]
        %v957 = vld [vmem:[#allocation8 + $0x110] sm:$0xff]
        %v958 = vld [vmem:[#allocation8 + $0x118] sm:$0xff]
        %v959 = vld [vmem:[#allocation8 + $0x120] sm:$0xff]
        %v960 = vld [vmem:[#allocation8 + $0x128] sm:$0xff]
        %v961 = vld [vmem:[#allocation8 + $0x130] sm:$0xff]
        %v962 = vld [vmem:[#allocation8 + $0x138] sm:$0xff]
        %v963 = vld [vmem:[#allocation8 + $0x140] sm:$0xff]
        %v964 = vld [vmem:[#allocation8 + $0x148] sm:$0xff]
        %v965 = vld [vmem:[#allocation8 + $0x150] sm:$0xff]
        %v966 = vld [vmem:[#allocation8 + $0x158] sm:$0xff]
        %v967 = vld [vmem:[#allocation8 + $0x160] sm:$0xff]
        %v968 = vld [vmem:[#allocation8 + $0x168] sm:$0xff]
        %v969 = vld [vmem:[#allocation8 + $0x170] sm:$0xff]
        %v970 = vld [vmem:[#allocation8 + $0x178] sm:$0xff]
        %v971 = vld [vmem:[#allocation8 + $0x180] sm:$0xff]
        %v972 = vld [vmem:[#allocation8 + $0x188] sm:$0xff]
        %v973 = vld [vmem:[#allocation8 + $0x190] sm:$0xff]
        %v974 = vld [vmem:[#allocation8 + $0x198] sm:$0xff]
        %v975 = vld [vmem:[#allocation8 + $0x1a0] sm:$0xff]
        %v976 = vld [vmem:[#allocation8 + $0x1a8] sm:$0xff]
        %v977 = vld [vmem:[#allocation8 + $0x1b0] sm:$0xff]
        %v978 = vld [vmem:[#allocation8 + $0x1b8] sm:$0xff]
        %v979 = vld [vmem:[#allocation8 + $0x1c0] sm:$0xff]
        %v980 = vld [vmem:[#allocation8 + $0x1c8] sm:$0xff]
        %v981 = vld [vmem:[#allocation8 + $0x1d0] sm:$0xff]
        %v982 = vld [vmem:[#allocation8 + $0x1d8] sm:$0xff]
        %v983 = vld [vmem:[#allocation8 + $0x1e0] sm:$0xff]
        %v984 = vld [vmem:[#allocation8 + $0x1e8] sm:$0xff]
        %v985 = vld [vmem:[#allocation8 + $0x1f0] sm:$0xff]
        %v986 = vld [vmem:[#allocation8 + $0x1f8] sm:$0xff]
        %v987 = vld [vmem:[%s4] sm:$0x3]
        %v989 = vperm.slane %v987, 0
        %v990 = vperm.slane %v987, 1
        %v1057 = vunpack.c.l.b16 %v923
        %v1058 = vunpack.c.h.b16 %v923
        %v1059 = vunpack.c.l.b16 %v924
        %v1060 = vunpack.c.h.b16 %v924
        %v1061 = vunpack.c.l.b16 %v925
        %v1062 = vunpack.c.h.b16 %v925
        %v1063 = vunpack.c.l.b16 %v926
        %v1064 = vunpack.c.h.b16 %v926
        %v1065 = vunpack.c.l.b16 %v927
        %v1066 = vunpack.c.h.b16 %v927
        %v1067 = vunpack.c.l.b16 %v928
        %v1068 = vunpack.c.h.b16 %v928
        %v1069 = vunpack.c.l.b16 %v929
        %v1070 = vunpack.c.h.b16 %v929
        %v1071 = vunpack.c.l.b16 %v930
        %v1072 = vunpack.c.h.b16 %v930
        %v1073 = vunpack.c.l.b16 %v931
        %v1074 = vunpack.c.h.b16 %v931
        %v1075 = vunpack.c.l.b16 %v932
        %v1076 = vunpack.c.h.b16 %v932
        %v1077 = vunpack.c.l.b16 %v933
        %v1078 = vunpack.c.h.b16 %v933
        %v1079 = vunpack.c.l.b16 %v934
        %v1080 = vunpack.c.h.b16 %v934
        %v1081 = vunpack.c.l.b16 %v935
        %v1082 = vunpack.c.h.b16 %v935
        %v1083 = vunpack.c.l.b16 %v936
        %v1084 = vunpack.c.h.b16 %v936
        %v1085 = vunpack.c.l.b16 %v937
        %v1086 = vunpack.c.h.b16 %v937
        %v1087 = vunpack.c.l.b16 %v938
        %v1088 = vunpack.c.h.b16 %v938
        %v1089 = vunpack.c.l.b16 %v939
        %v1090 = vunpack.c.h.b16 %v939
        %v1091 = vunpack.c.l.b16 %v940
        %v1092 = vunpack.c.h.b16 %v940
        %v1093 = vunpack.c.l.b16 %v941
        %v1094 = vunpack.c.h.b16 %v941
        %v1095 = vunpack.c.l.b16 %v942
        %v1096 = vunpack.c.h.b16 %v942
        %v1097 = vunpack.c.l.b16 %v943
        %v1098 = vunpack.c.h.b16 %v943
        %v1099 = vunpack.c.l.b16 %v944
        %v1100 = vunpack.c.h.b16 %v944
        %v1101 = vunpack.c.l.b16 %v945
        %v1102 = vunpack.c.h.b16 %v945
        %v1103 = vunpack.c.l.b16 %v946
        %v1104 = vunpack.c.h.b16 %v946
        %v1105 = vunpack.c.l.b16 %v947
        %v1106 = vunpack.c.h.b16 %v947
        %v1107 = vunpack.c.l.b16 %v948
        %v1108 = vunpack.c.h.b16 %v948
        %v1109 = vunpack.c.l.b16 %v949
        %v1110 = vunpack.c.h.b16 %v949
        %v1111 = vunpack.c.l.b16 %v950
        %v1112 = vunpack.c.h.b16 %v950
        %v1113 = vunpack.c.l.b16 %v951
        %v1114 = vunpack.c.h.b16 %v951
        %v1115 = vunpack.c.l.b16 %v952
        %v1116 = vunpack.c.h.b16 %v952
        %v1117 = vunpack.c.l.b16 %v953
        %v1118 = vunpack.c.h.b16 %v953
        %v1119 = vunpack.c.l.b16 %v954
        %v1120 = vunpack.c.h.b16 %v954
        %v1121 = vunpack.c.l.b16 %v955
        %v1122 = vunpack.c.h.b16 %v955
        %v1123 = vunpack.c.l.b16 %v956
        %v1124 = vunpack.c.h.b16 %v956
        %v1125 = vunpack.c.l.b16 %v957
        %v1126 = vunpack.c.h.b16 %v957
        %v1127 = vunpack.c.l.b16 %v958
        %v1128 = vunpack.c.h.b16 %v958
        %v1129 = vunpack.c.l.b16 %v959
        %v1130 = vunpack.c.h.b16 %v959
        %v1131 = vunpack.c.l.b16 %v960
        %v1132 = vunpack.c.h.b16 %v960
        %v1133 = vunpack.c.l.b16 %v961
        %v1134 = vunpack.c.h.b16 %v961
        %v1135 = vunpack.c.l.b16 %v962
        %v1136 = vunpack.c.h.b16 %v962
        %v1137 = vunpack.c.l.b16 %v963
        %v1138 = vunpack.c.h.b16 %v963
        %v1139 = vunpack.c.l.b16 %v964
        %v1140 = vunpack.c.h.b16 %v964
        %v1141 = vunpack.c.l.b16 %v965
        %v1142 = vunpack.c.h.b16 %v965
        %v1143 = vunpack.c.l.b16 %v966
        %v1144 = vunpack.c.h.b16 %v966
        %v1145 = vunpack.c.l.b16 %v967
        %v1146 = vunpack.c.h.b16 %v967
        %v1147 = vunpack.c.l.b16 %v968
        %v1148 = vunpack.c.h.b16 %v968
        %v1149 = vunpack.c.l.b16 %v969
        %v1150 = vunpack.c.h.b16 %v969
        %v1151 = vunpack.c.l.b16 %v970
        %v1152 = vunpack.c.h.b16 %v970
        %v1153 = vunpack.c.l.b16 %v971
        %v1154 = vunpack.c.h.b16 %v971
        %v1155 = vunpack.c.l.b16 %v972
        %v1156 = vunpack.c.h.b16 %v972
        %v1157 = vunpack.c.l.b16 %v973
        %v1158 = vunpack.c.h.b16 %v973
        %v1159 = vunpack.c.l.b16 %v974
        %v1160 = vunpack.c.h.b16 %v974
        %v1161 = vunpack.c.l.b16 %v975
        %v1162 = vunpack.c.h.b16 %v975
        %v1163 = vunpack.c.l.b16 %v976
        %v1164 = vunpack.c.h.b16 %v976
        %v1165 = vunpack.c.l.b16 %v977
        %v1166 = vunpack.c.h.b16 %v977
        %v1167 = vunpack.c.l.b16 %v978
        %v1168 = vunpack.c.h.b16 %v978
        %v1169 = vunpack.c.l.b16 %v979
        %v1170 = vunpack.c.h.b16 %v979
        %v1171 = vunpack.c.l.b16 %v980
        %v1172 = vunpack.c.h.b16 %v980
        %v1173 = vunpack.c.l.b16 %v981
        %v1174 = vunpack.c.h.b16 %v981
        %v1175 = vunpack.c.l.b16 %v982
        %v1176 = vunpack.c.h.b16 %v982
        %v1177 = vunpack.c.l.b16 %v983
        %v1178 = vunpack.c.h.b16 %v983
        %v1179 = vunpack.c.l.b16 %v984
        %v1180 = vunpack.c.h.b16 %v984
        %v1181 = vunpack.c.l.b16 %v985
        %v1182 = vunpack.c.h.b16 %v985
        %v1183 = vunpack.c.l.b16 %v986
        %v1184 = vunpack.c.h.b16 %v986
        %v1185 = vpack.c.b16 %v1059, %v1057
        %v1186 = vpack.c.b16 %v1060, %v1058
        %v1187 = vpack.c.b16 %v1063, %v1061
        %v1188 = vpack.c.b16 %v1064, %v1062
        %v1189 = vpack.c.b16 %v1067, %v1065
        %v1190 = vpack.c.b16 %v1068, %v1066
        %v1191 = vpack.c.b16 %v1071, %v1069
        %v1192 = vpack.c.b16 %v1072, %v1070
        %v1193 = vpack.c.b16 %v1075, %v1073
        %v1194 = vpack.c.b16 %v1076, %v1074
        %v1195 = vpack.c.b16 %v1079, %v1077
        %v1196 = vpack.c.b16 %v1080, %v1078
        %v1197 = vpack.c.b16 %v1083, %v1081
        %v1198 = vpack.c.b16 %v1084, %v1082
        %v1199 = vpack.c.b16 %v1087, %v1085
        %v1200 = vpack.c.b16 %v1088, %v1086
        %v1201 = vpack.c.b16 %v1091, %v1089
        %v1202 = vpack.c.b16 %v1092, %v1090
        %v1203 = vpack.c.b16 %v1095, %v1093
        %v1204 = vpack.c.b16 %v1096, %v1094
        %v1205 = vpack.c.b16 %v1099, %v1097
        %v1206 = vpack.c.b16 %v1100, %v1098
        %v1207 = vpack.c.b16 %v1103, %v1101
        %v1208 = vpack.c.b16 %v1104, %v1102
        %v1209 = vpack.c.b16 %v1107, %v1105
        %v1210 = vpack.c.b16 %v1108, %v1106
        %v1211 = vpack.c.b16 %v1111, %v1109
        %v1212 = vpack.c.b16 %v1112, %v1110
        %v1213 = vpack.c.b16 %v1115, %v1113
        %v1214 = vpack.c.b16 %v1116, %v1114
        %v1215 = vpack.c.b16 %v1119, %v1117
        %v1216 = vpack.c.b16 %v1120, %v1118
        %v1217 = vpack.c.b16 %v1123, %v1121
        %v1218 = vpack.c.b16 %v1124, %v1122
        %v1219 = vpack.c.b16 %v1127, %v1125
        %v1220 = vpack.c.b16 %v1128, %v1126
        %v1221 = vpack.c.b16 %v1131, %v1129
        %v1222 = vpack.c.b16 %v1132, %v1130
        %v1223 = vpack.c.b16 %v1135, %v1133
        %v1224 = vpack.c.b16 %v1136, %v1134
        %v1225 = vpack.c.b16 %v1139, %v1137
        %v1226 = vpack.c.b16 %v1140, %v1138
        %v1227 = vpack.c.b16 %v1143, %v1141
        %v1228 = vpack.c.b16 %v1144, %v1142
        %v1229 = vpack.c.b16 %v1147, %v1145
        %v1230 = vpack.c.b16 %v1148, %v1146
        %v1231 = vpack.c.b16 %v1151, %v1149
        %v1232 = vpack.c.b16 %v1152, %v1150
        %v1233 = vpack.c.b16 %v1155, %v1153
        %v1234 = vpack.c.b16 %v1156, %v1154
        %v1235 = vpack.c.b16 %v1159, %v1157
        %v1236 = vpack.c.b16 %v1160, %v1158
        %v1237 = vpack.c.b16 %v1163, %v1161
        %v1238 = vpack.c.b16 %v1164, %v1162
        %v1239 = vpack.c.b16 %v1167, %v1165
        %v1240 = vpack.c.b16 %v1168, %v1166
        %v1241 = vpack.c.b16 %v1171, %v1169
        %v1242 = vpack.c.b16 %v1172, %v1170
        %v1243 = vpack.c.b16 %v1175, %v1173
        %v1244 = vpack.c.b16 %v1176, %v1174
        %v1245 = vpack.c.b16 %v1179, %v1177
        %v1246 = vpack.c.b16 %v1180, %v1178
        %v1247 = vpack.c.b16 %v1183, %v1181
        %v1248 = vpack.c.b16 %v1184, %v1182
        %1313 = vmatpush.bf16.msra.mxu0 %v1199
        %1314 = vmatpush.bf16.msra.mxu0 %v1197
        %1315 = vmatpush.bf16.msra.mxu0 %v1195
        %1316 = vmatpush.bf16.msra.mxu0 %v1193
        %1317 = vmatpush.bf16.msra.mxu0 %v1191
        %1318 = vmatpush.bf16.msra.mxu0 %v1189
        %1319 = vmatpush.bf16.msra.mxu0 %v1187
        %1320 = vmatpush.bf16.msra.mxu0 %v1185
        %1321 = vmatmul.bf16.gmra.mxu0 %v891
        %v1322 = vpop.f32.mrf.mxu0
        %v1323 = vadd.f32 %v989, %v1322
        %v1324 = vpop.f32.mrf.mxu0
        %v1325 = vadd.f32 %v989, %v1324
        %1326 = vmatmul.bf16.gmra.mxu0 %v895
        %v1327 = vpop.f32.mrf.mxu0
        %v1328 = vadd.f32 %v989, %v1327
        %v1329 = vpop.f32.mrf.mxu0
        %v1330 = vadd.f32 %v989, %v1329
        %1331 = vmatmul.bf16.gmra.mxu0 %v899
        %v1332 = vpop.f32.mrf.mxu0
        %v1333 = vadd.f32 %v989, %v1332
        %v1334 = vpop.f32.mrf.mxu0
        %v1335 = vadd.f32 %v989, %v1334
        %1336 = vmatmul.bf16.gmra.mxu0 %v903
        %v1337 = vpop.f32.mrf.mxu0
        %v1338 = vadd.f32 %v989, %v1337
        %v1339 = vpop.f32.mrf.mxu0
        %v1340 = vadd.f32 %v989, %v1339
        %1341 = vmatmul.bf16.gmra.mxu0 %v907
        %v1342 = vpop.f32.mrf.mxu0
        %v1343 = vadd.f32 %v989, %v1342
        %v1344 = vpop.f32.mrf.mxu0
        %v1345 = vadd.f32 %v989, %v1344
        %1346 = vmatmul.bf16.gmra.mxu0 %v911
        %v1347 = vpop.f32.mrf.mxu0
        %v1348 = vadd.f32 %v989, %v1347
        %v1349 = vpop.f32.mrf.mxu0
        %v1350 = vadd.f32 %v989, %v1349
        %1351 = vmatmul.bf16.gmra.mxu0 %v915
        %v1352 = vpop.f32.mrf.mxu0
        %v1353 = vadd.f32 %v989, %v1352
        %v1354 = vpop.f32.mrf.mxu0
        %v1355 = vadd.f32 %v989, %v1354
        %1356 = vmatmul.bf16.gmra.mxu0 %v919
        %v1357 = vpop.f32.mrf.mxu0
        %v1358 = vadd.f32 %v989, %v1357
        %v1359 = vpop.f32.mrf.mxu0
        %v1360 = vadd.f32 %v989, %v1359
        %1361 = vdwg.mxu0
        %1362 = vmatpush.bf16.msra.mxu0 %v1215
        %1363 = vmatpush.bf16.msra.mxu0 %v1213
        %1364 = vmatpush.bf16.msra.mxu0 %v1211
        %1365 = vmatpush.bf16.msra.mxu0 %v1209
        %1366 = vmatpush.bf16.msra.mxu0 %v1207
        %1367 = vmatpush.bf16.msra.mxu0 %v1205
        %1368 = vmatpush.bf16.msra.mxu0 %v1203
        %1369 = vmatpush.bf16.msra.mxu0 %v1201
        %1370 = vmatmul.bf16.gmra.mxu0 %v892
        %v1371 = vpop.f32.mrf.mxu0
        %v1372 = vadd.f32 %v1323, %v1371
        %v1373 = vpop.f32.mrf.mxu0
        %v1374 = vadd.f32 %v1325, %v1373
        %1375 = vmatmul.bf16.gmra.mxu0 %v896
        %v1376 = vpop.f32.mrf.mxu0
        %v1377 = vadd.f32 %v1328, %v1376
        %v1378 = vpop.f32.mrf.mxu0
        %v1379 = vadd.f32 %v1330, %v1378
        %1380 = vmatmul.bf16.gmra.mxu0 %v900
        %v1381 = vpop.f32.mrf.mxu0
        %v1382 = vadd.f32 %v1333, %v1381
        %v1383 = vpop.f32.mrf.mxu0
        %v1384 = vadd.f32 %v1335, %v1383
        %1385 = vmatmul.bf16.gmra.mxu0 %v904
        %v1386 = vpop.f32.mrf.mxu0
        %v1387 = vadd.f32 %v1338, %v1386
        %v1388 = vpop.f32.mrf.mxu0
        %v1389 = vadd.f32 %v1340, %v1388
        %1390 = vmatmul.bf16.gmra.mxu0 %v908
        %v1391 = vpop.f32.mrf.mxu0
        %v1392 = vadd.f32 %v1343, %v1391
        %v1393 = vpop.f32.mrf.mxu0
        %v1394 = vadd.f32 %v1345, %v1393
        %1395 = vmatmul.bf16.gmra.mxu0 %v912
        %v1396 = vpop.f32.mrf.mxu0
        %v1397 = vadd.f32 %v1348, %v1396
        %v1398 = vpop.f32.mrf.mxu0
        %v1399 = vadd.f32 %v1350, %v1398
        %1400 = vmatmul.bf16.gmra.mxu0 %v916
        %v1401 = vpop.f32.mrf.mxu0
        %v1402 = vadd.f32 %v1353, %v1401
        %v1403 = vpop.f32.mrf.mxu0
        %v1404 = vadd.f32 %v1355, %v1403
        %1405 = vmatmul.bf16.gmra.mxu0 %v920
        %v1406 = vpop.f32.mrf.mxu0
        %v1407 = vadd.f32 %v1358, %v1406
        %v1408 = vpop.f32.mrf.mxu0
        %v1409 = vadd.f32 %v1360, %v1408
        %1410 = vdwg.mxu0
        %1411 = vmatpush.bf16.msra.mxu0 %v1231
        %1412 = vmatpush.bf16.msra.mxu0 %v1229
        %1413 = vmatpush.bf16.msra.mxu0 %v1227
        %1414 = vmatpush.bf16.msra.mxu0 %v1225
        %1415 = vmatpush.bf16.msra.mxu0 %v1223
        %1416 = vmatpush.bf16.msra.mxu0 %v1221
        %1417 = vmatpush.bf16.msra.mxu0 %v1219
        %1418 = vmatpush.bf16.msra.mxu0 %v1217
        %1419 = vmatmul.bf16.gmra.mxu0 %v893
        %v1420 = vpop.f32.mrf.mxu0
        %v1421 = vadd.f32 %v1372, %v1420
        %v1422 = vpop.f32.mrf.mxu0
        %v1423 = vadd.f32 %v1374, %v1422
        %1424 = vmatmul.bf16.gmra.mxu0 %v897
        %v1425 = vpop.f32.mrf.mxu0
        %v1426 = vadd.f32 %v1377, %v1425
        %v1427 = vpop.f32.mrf.mxu0
        %v1428 = vadd.f32 %v1379, %v1427
        %1429 = vmatmul.bf16.gmra.mxu0 %v901
        %v1430 = vpop.f32.mrf.mxu0
        %v1431 = vadd.f32 %v1382, %v1430
        %v1432 = vpop.f32.mrf.mxu0
        %v1433 = vadd.f32 %v1384, %v1432
        %1434 = vmatmul.bf16.gmra.mxu0 %v905
        %v1435 = vpop.f32.mrf.mxu0
        %v1436 = vadd.f32 %v1387, %v1435
        %v1437 = vpop.f32.mrf.mxu0
        %v1438 = vadd.f32 %v1389, %v1437
        %1439 = vmatmul.bf16.gmra.mxu0 %v909
        %v1440 = vpop.f32.mrf.mxu0
        %v1441 = vadd.f32 %v1392, %v1440
        %v1442 = vpop.f32.mrf.mxu0
        %v1443 = vadd.f32 %v1394, %v1442
        %1444 = vmatmul.bf16.gmra.mxu0 %v913
        %v1445 = vpop.f32.mrf.mxu0
        %v1446 = vadd.f32 %v1397, %v1445
        %v1447 = vpop.f32.mrf.mxu0
        %v1448 = vadd.f32 %v1399, %v1447
        %1449 = vmatmul.bf16.gmra.mxu0 %v917
        %v1450 = vpop.f32.mrf.mxu0
        %v1451 = vadd.f32 %v1402, %v1450
        %v1452 = vpop.f32.mrf.mxu0
        %v1453 = vadd.f32 %v1404, %v1452
        %1454 = vmatmul.bf16.gmra.mxu0 %v921
        %v1455 = vpop.f32.mrf.mxu0
        %v1456 = vadd.f32 %v1407, %v1455
        %v1457 = vpop.f32.mrf.mxu0
        %v1458 = vadd.f32 %v1409, %v1457
        %1459 = vdwg.mxu0
        %1460 = vmatpush.bf16.msra.mxu0 %v1247
        %1461 = vmatpush.bf16.msra.mxu0 %v1245
        %1462 = vmatpush.bf16.msra.mxu0 %v1243
        %1463 = vmatpush.bf16.msra.mxu0 %v1241
        %1464 = vmatpush.bf16.msra.mxu0 %v1239
        %1465 = vmatpush.bf16.msra.mxu0 %v1237
        %1466 = vmatpush.bf16.msra.mxu0 %v1235
        %1467 = vmatpush.bf16.msra.mxu0 %v1233
        %1468 = vmatmul.bf16.gmra.mxu0 %v894
        %v1469 = vpop.f32.mrf.mxu0
        %v1470 = vadd.f32 %v1421, %v1469
        %v1471 = vpop.f32.mrf.mxu0
        %v1472 = vadd.f32 %v1423, %v1471
        %1473 = vmatmul.bf16.gmra.mxu0 %v898
        %v1474 = vpop.f32.mrf.mxu0
        %v1475 = vadd.f32 %v1426, %v1474
        %v1476 = vpop.f32.mrf.mxu0
        %v1477 = vadd.f32 %v1428, %v1476
        %1478 = vmatmul.bf16.gmra.mxu0 %v902
        %v1479 = vpop.f32.mrf.mxu0
        %v1480 = vadd.f32 %v1431, %v1479
        %v1481 = vpop.f32.mrf.mxu0
        %v1482 = vadd.f32 %v1433, %v1481
        %1483 = vmatmul.bf16.gmra.mxu0 %v906
        %v1484 = vpop.f32.mrf.mxu0
        %v1485 = vadd.f32 %v1436, %v1484
        %v1486 = vpop.f32.mrf.mxu0
        %v1487 = vadd.f32 %v1438, %v1486
        %1488 = vmatmul.bf16.gmra.mxu0 %v910
        %v1489 = vpop.f32.mrf.mxu0
        %v1490 = vadd.f32 %v1441, %v1489
        %v1491 = vpop.f32.mrf.mxu0
        %v1492 = vadd.f32 %v1443, %v1491
        %1493 = vmatmul.bf16.gmra.mxu0 %v914
        %v1494 = vpop.f32.mrf.mxu0
        %v1495 = vadd.f32 %v1446, %v1494
        %v1496 = vpop.f32.mrf.mxu0
        %v1497 = vadd.f32 %v1448, %v1496
        %1498 = vmatmul.bf16.gmra.mxu0 %v918
        %v1499 = vpop.f32.mrf.mxu0
        %v1500 = vadd.f32 %v1451, %v1499
        %v1501 = vpop.f32.mrf.mxu0
        %v1502 = vadd.f32 %v1453, %v1501
        %1503 = vmatmul.bf16.gmra.mxu0 %v922
        %v1504 = vpop.f32.mrf.mxu0
        %v1505 = vadd.f32 %v1456, %v1504
        %v1506 = vpop.f32.mrf.mxu0
        %v1507 = vadd.f32 %v1458, %v1506
        %1508 = vdwg.mxu0
        %1509 = vmatpush.bf16.msra.mxu0 %v1200
        %1510 = vmatpush.bf16.msra.mxu0 %v1198
        %1511 = vmatpush.bf16.msra.mxu0 %v1196
        %1512 = vmatpush.bf16.msra.mxu0 %v1194
        %1513 = vmatpush.bf16.msra.mxu0 %v1192
        %1514 = vmatpush.bf16.msra.mxu0 %v1190
        %1515 = vmatpush.bf16.msra.mxu0 %v1188
        %1516 = vmatpush.bf16.msra.mxu0 %v1186
        %1517 = vmatmul.bf16.gmra.mxu0 %v891
        %v1518 = vpop.f32.mrf.mxu0
        %v1519 = vadd.f32 %v990, %v1518
        %v1520 = vpop.f32.mrf.mxu0
        %v1521 = vadd.f32 %v990, %v1520
        %1522 = vmatmul.bf16.gmra.mxu0 %v895
        %v1523 = vpop.f32.mrf.mxu0
        %v1524 = vadd.f32 %v990, %v1523
        %v1525 = vpop.f32.mrf.mxu0
        %v1526 = vadd.f32 %v990, %v1525
        %1527 = vmatmul.bf16.gmra.mxu0 %v899
        %v1528 = vpop.f32.mrf.mxu0
        %v1529 = vadd.f32 %v990, %v1528
        %v1530 = vpop.f32.mrf.mxu0
        %v1531 = vadd.f32 %v990, %v1530
        %1532 = vmatmul.bf16.gmra.mxu0 %v903
        %v1533 = vpop.f32.mrf.mxu0
        %v1534 = vadd.f32 %v990, %v1533
        %v1535 = vpop.f32.mrf.mxu0
        %v1536 = vadd.f32 %v990, %v1535
        %1537 = vmatmul.bf16.gmra.mxu0 %v907
        %v1538 = vpop.f32.mrf.mxu0
        %v1539 = vadd.f32 %v990, %v1538
        %v1540 = vpop.f32.mrf.mxu0
        %v1541 = vadd.f32 %v990, %v1540
        %1542 = vmatmul.bf16.gmra.mxu0 %v911
        %v1543 = vpop.f32.mrf.mxu0
        %v1544 = vadd.f32 %v990, %v1543
        %v1545 = vpop.f32.mrf.mxu0
        %v1546 = vadd.f32 %v990, %v1545
        %1547 = vmatmul.bf16.gmra.mxu0 %v915
        %v1548 = vpop.f32.mrf.mxu0
        %v1549 = vadd.f32 %v990, %v1548
        %v1550 = vpop.f32.mrf.mxu0
        %v1551 = vadd.f32 %v990, %v1550
        %1552 = vmatmul.bf16.gmra.mxu0 %v919
        %v1553 = vpop.f32.mrf.mxu0
        %v1554 = vadd.f32 %v990, %v1553
        %v1555 = vpop.f32.mrf.mxu0
        %v1556 = vadd.f32 %v990, %v1555
        %1557 = vdwg.mxu0
        %1558 = vmatpush.bf16.msra.mxu0 %v1216
        %1559 = vmatpush.bf16.msra.mxu0 %v1214
        %1560 = vmatpush.bf16.msra.mxu0 %v1212
        %1561 = vmatpush.bf16.msra.mxu0 %v1210
        %1562 = vmatpush.bf16.msra.mxu0 %v1208
        %1563 = vmatpush.bf16.msra.mxu0 %v1206
        %1564 = vmatpush.bf16.msra.mxu0 %v1204
        %1565 = vmatpush.bf16.msra.mxu0 %v1202
        %1566 = vmatmul.bf16.gmra.mxu0 %v892
        %v1567 = vpop.f32.mrf.mxu0
        %v1568 = vadd.f32 %v1519, %v1567
        %v1569 = vpop.f32.mrf.mxu0
        %v1570 = vadd.f32 %v1521, %v1569
        %1571 = vmatmul.bf16.gmra.mxu0 %v896
        %v1572 = vpop.f32.mrf.mxu0
        %v1573 = vadd.f32 %v1524, %v1572
        %v1574 = vpop.f32.mrf.mxu0
        %v1575 = vadd.f32 %v1526, %v1574
        %1576 = vmatmul.bf16.gmra.mxu0 %v900
        %v1577 = vpop.f32.mrf.mxu0
        %v1578 = vadd.f32 %v1529, %v1577
        %v1579 = vpop.f32.mrf.mxu0
        %v1580 = vadd.f32 %v1531, %v1579
        %1581 = vmatmul.bf16.gmra.mxu0 %v904
        %v1582 = vpop.f32.mrf.mxu0
        %v1583 = vadd.f32 %v1534, %v1582
        %v1584 = vpop.f32.mrf.mxu0
        %v1585 = vadd.f32 %v1536, %v1584
        %1586 = vmatmul.bf16.gmra.mxu0 %v908
        %v1587 = vpop.f32.mrf.mxu0
        %v1588 = vadd.f32 %v1539, %v1587
        %v1589 = vpop.f32.mrf.mxu0
        %v1590 = vadd.f32 %v1541, %v1589
        %1591 = vmatmul.bf16.gmra.mxu0 %v912
        %v1592 = vpop.f32.mrf.mxu0
        %v1593 = vadd.f32 %v1544, %v1592
        %v1594 = vpop.f32.mrf.mxu0
        %v1595 = vadd.f32 %v1546, %v1594
        %1596 = vmatmul.bf16.gmra.mxu0 %v916
        %v1597 = vpop.f32.mrf.mxu0
        %v1598 = vadd.f32 %v1549, %v1597
        %v1599 = vpop.f32.mrf.mxu0
        %v1600 = vadd.f32 %v1551, %v1599
        %1601 = vmatmul.bf16.gmra.mxu0 %v920
        %v1602 = vpop.f32.mrf.mxu0
        %v1603 = vadd.f32 %v1554, %v1602
        %v1604 = vpop.f32.mrf.mxu0
        %v1605 = vadd.f32 %v1556, %v1604
        %1606 = vdwg.mxu0
        %1607 = vmatpush.bf16.msra.mxu0 %v1232
        %1608 = vmatpush.bf16.msra.mxu0 %v1230
        %1609 = vmatpush.bf16.msra.mxu0 %v1228
        %1610 = vmatpush.bf16.msra.mxu0 %v1226
        %1611 = vmatpush.bf16.msra.mxu0 %v1224
        %1612 = vmatpush.bf16.msra.mxu0 %v1222
        %1613 = vmatpush.bf16.msra.mxu0 %v1220
        %1614 = vmatpush.bf16.msra.mxu0 %v1218
        %1615 = vmatmul.bf16.gmra.mxu0 %v893
        %v1616 = vpop.f32.mrf.mxu0
        %v1617 = vadd.f32 %v1568, %v1616
        %v1618 = vpop.f32.mrf.mxu0
        %v1619 = vadd.f32 %v1570, %v1618
        %1620 = vmatmul.bf16.gmra.mxu0 %v897
        %v1621 = vpop.f32.mrf.mxu0
        %v1622 = vadd.f32 %v1573, %v1621
        %v1623 = vpop.f32.mrf.mxu0
        %v1624 = vadd.f32 %v1575, %v1623
        %1625 = vmatmul.bf16.gmra.mxu0 %v901
        %v1626 = vpop.f32.mrf.mxu0
        %v1627 = vadd.f32 %v1578, %v1626
        %v1628 = vpop.f32.mrf.mxu0
        %v1629 = vadd.f32 %v1580, %v1628
        %1630 = vmatmul.bf16.gmra.mxu0 %v905
        %v1631 = vpop.f32.mrf.mxu0
        %v1632 = vadd.f32 %v1583, %v1631
        %v1633 = vpop.f32.mrf.mxu0
        %v1634 = vadd.f32 %v1585, %v1633
        %1635 = vmatmul.bf16.gmra.mxu0 %v909
        %v1636 = vpop.f32.mrf.mxu0
        %v1637 = vadd.f32 %v1588, %v1636
        %v1638 = vpop.f32.mrf.mxu0
        %v1639 = vadd.f32 %v1590, %v1638
        %1640 = vmatmul.bf16.gmra.mxu0 %v913
        %v1641 = vpop.f32.mrf.mxu0
        %v1642 = vadd.f32 %v1593, %v1641
        %v1643 = vpop.f32.mrf.mxu0
        %v1644 = vadd.f32 %v1595, %v1643
        %1645 = vmatmul.bf16.gmra.mxu0 %v917
        %v1646 = vpop.f32.mrf.mxu0
        %v1647 = vadd.f32 %v1598, %v1646
        %v1648 = vpop.f32.mrf.mxu0
        %v1649 = vadd.f32 %v1600, %v1648
        %1650 = vmatmul.bf16.gmra.mxu0 %v921
        %v1651 = vpop.f32.mrf.mxu0
        %v1652 = vadd.f32 %v1603, %v1651
        %v1653 = vpop.f32.mrf.mxu0
        %v1654 = vadd.f32 %v1605, %v1653
        %1655 = vdwg.mxu0
        %1656 = vmatpush.bf16.msra.mxu0 %v1248
        %1657 = vmatpush.bf16.msra.mxu0 %v1246
        %1658 = vmatpush.bf16.msra.mxu0 %v1244
        %1659 = vmatpush.bf16.msra.mxu0 %v1242
        %1660 = vmatpush.bf16.msra.mxu0 %v1240
        %1661 = vmatpush.bf16.msra.mxu0 %v1238
        %1662 = vmatpush.bf16.msra.mxu0 %v1236
        %1663 = vmatpush.bf16.msra.mxu0 %v1234
        %1664 = vmatmul.bf16.gmra.mxu0 %v894
        %v1665 = vpop.f32.mrf.mxu0
        %v1666 = vadd.f32 %v1617, %v1665
        %v1667 = vpop.f32.mrf.mxu0
        %v1668 = vadd.f32 %v1619, %v1667
        %1669 = vmatmul.bf16.gmra.mxu0 %v898
        %v1670 = vpop.f32.mrf.mxu0
        %v1671 = vadd.f32 %v1622, %v1670
        %v1672 = vpop.f32.mrf.mxu0
        %v1673 = vadd.f32 %v1624, %v1672
        %1674 = vmatmul.bf16.gmra.mxu0 %v902
        %v1675 = vpop.f32.mrf.mxu0
        %v1676 = vadd.f32 %v1627, %v1675
        %v1677 = vpop.f32.mrf.mxu0
        %v1678 = vadd.f32 %v1629, %v1677
        %1679 = vmatmul.bf16.gmra.mxu0 %v906
        %v1680 = vpop.f32.mrf.mxu0
        %v1681 = vadd.f32 %v1632, %v1680
        %v1682 = vpop.f32.mrf.mxu0
        %v1683 = vadd.f32 %v1634, %v1682
        %1684 = vmatmul.bf16.gmra.mxu0 %v910
        %v1685 = vpop.f32.mrf.mxu0
        %v1686 = vadd.f32 %v1637, %v1685
        %v1687 = vpop.f32.mrf.mxu0
        %v1688 = vadd.f32 %v1639, %v1687
        %1689 = vmatmul.bf16.gmra.mxu0 %v914
        %v1690 = vpop.f32.mrf.mxu0
        %v1691 = vadd.f32 %v1642, %v1690
        %v1692 = vpop.f32.mrf.mxu0
        %v1693 = vadd.f32 %v1644, %v1692
        %1694 = vmatmul.bf16.gmra.mxu0 %v918
        %v1695 = vpop.f32.mrf.mxu0
        %v1696 = vadd.f32 %v1647, %v1695
        %v1697 = vpop.f32.mrf.mxu0
        %v1698 = vadd.f32 %v1649, %v1697
        %1699 = vmatmul.bf16.gmra.mxu0 %v922
        %v1700 = vpop.f32.mrf.mxu0
        %v1701 = vadd.f32 %v1652, %v1700
        %v1702 = vpop.f32.mrf.mxu0
        %v1703 = vadd.f32 %v1654, %v1702
        %1704 = vdwg.mxu0
        %v1705 = vmax.f32 %v1470, 0.0
        %v1706 = vmax.f32 %v1666, 0.0
        %v1707 = vmax.f32 %v1472, 0.0
        %v1708 = vmax.f32 %v1668, 0.0
        %v1709 = vmax.f32 %v1475, 0.0
        %v1710 = vmax.f32 %v1671, 0.0
        %v1711 = vmax.f32 %v1477, 0.0
        %v1712 = vmax.f32 %v1673, 0.0
        %v1713 = vmax.f32 %v1480, 0.0
        %v1714 = vmax.f32 %v1676, 0.0
        %v1715 = vmax.f32 %v1482, 0.0
        %v1716 = vmax.f32 %v1678, 0.0
        %v1717 = vmax.f32 %v1485, 0.0
        %v1718 = vmax.f32 %v1681, 0.0
        %v1719 = vmax.f32 %v1487, 0.0
        %v1720 = vmax.f32 %v1683, 0.0
        %v1721 = vmax.f32 %v1490, 0.0
        %v1722 = vmax.f32 %v1686, 0.0
        %v1723 = vmax.f32 %v1492, 0.0
        %v1724 = vmax.f32 %v1688, 0.0
        %v1725 = vmax.f32 %v1495, 0.0
        %v1726 = vmax.f32 %v1691, 0.0
        %v1727 = vmax.f32 %v1497, 0.0
        %v1728 = vmax.f32 %v1693, 0.0
        %v1729 = vmax.f32 %v1500, 0.0
        %v1730 = vmax.f32 %v1696, 0.0
        %v1731 = vmax.f32 %v1502, 0.0
        %v1732 = vmax.f32 %v1698, 0.0
        %v1733 = vmax.f32 %v1505, 0.0
        %v1734 = vmax.f32 %v1701, 0.0
        %v1735 = vmax.f32 %v1507, 0.0
        %v1736 = vmax.f32 %v1703, 0.0
        %v1737 = vpack.c.bf16 %v1707, %v1705
        %v1738 = vpack.c.bf16 %v1708, %v1706
        %v1739 = vpack.c.bf16 %v1711, %v1709
        %v1740 = vpack.c.bf16 %v1712, %v1710
        %v1741 = vpack.c.bf16 %v1715, %v1713
        %v1742 = vpack.c.bf16 %v1716, %v1714
        %v1743 = vpack.c.bf16 %v1719, %v1717
        %v1744 = vpack.c.bf16 %v1720, %v1718
        %v1745 = vpack.c.bf16 %v1723, %v1721
        %v1746 = vpack.c.bf16 %v1724, %v1722
        %v1747 = vpack.c.bf16 %v1727, %v1725
        %v1748 = vpack.c.bf16 %v1728, %v1726
        %v1749 = vpack.c.bf16 %v1731, %v1729
        %v1750 = vpack.c.bf16 %v1732, %v1730
        %v1751 = vpack.c.bf16 %v1735, %v1733
        %v1752 = vpack.c.bf16 %v1736, %v1734
        %v1753 = vld [vmem:[#allocation10] sm:$0xf]
        %v1754 = vld [vmem:[#allocation10 + $0x4] sm:$0xf]
        %v1755 = vld [vmem:[#allocation10 + $0x8] sm:$0xf]
        %v1756 = vld [vmem:[#allocation10 + $0xc] sm:$0xf]
        %v1757 = vld [vmem:[#allocation10 + $0x10] sm:$0xf]
        %v1758 = vld [vmem:[#allocation10 + $0x14] sm:$0xf]
        %v1759 = vld [vmem:[#allocation10 + $0x18] sm:$0xf]
        %v1760 = vld [vmem:[#allocation10 + $0x1c] sm:$0xf]
        %v1761 = vld [vmem:[#allocation10 + $0x20] sm:$0xf]
        %v1762 = vld [vmem:[#allocation10 + $0x24] sm:$0xf]
        %v1763 = vld [vmem:[#allocation10 + $0x28] sm:$0xf]
        %v1764 = vld [vmem:[#allocation10 + $0x2c] sm:$0xf]
        %v1765 = vld [vmem:[#allocation10 + $0x30] sm:$0xf]
        %v1766 = vld [vmem:[#allocation10 + $0x34] sm:$0xf]
        %v1767 = vld [vmem:[#allocation10 + $0x38] sm:$0xf]
        %v1768 = vld [vmem:[#allocation10 + $0x3c] sm:$0xf]
        %v1769 = vld [vmem:[#allocation10 + $0x40] sm:$0xf]
        %v1770 = vld [vmem:[#allocation10 + $0x44] sm:$0xf]
        %v1771 = vld [vmem:[#allocation10 + $0x48] sm:$0xf]
        %v1772 = vld [vmem:[#allocation10 + $0x4c] sm:$0xf]
        %v1773 = vld [vmem:[#allocation10 + $0x50] sm:$0xf]
        %v1774 = vld [vmem:[#allocation10 + $0x54] sm:$0xf]
        %v1775 = vld [vmem:[#allocation10 + $0x58] sm:$0xf]
        %v1776 = vld [vmem:[#allocation10 + $0x5c] sm:$0xf]
        %v1777 = vld [vmem:[#allocation10 + $0x60] sm:$0xf]
        %v1778 = vld [vmem:[#allocation10 + $0x64] sm:$0xf]
        %v1779 = vld [vmem:[#allocation10 + $0x68] sm:$0xf]
        %v1780 = vld [vmem:[#allocation10 + $0x6c] sm:$0xf]
        %v1781 = vld [vmem:[#allocation10 + $0x70] sm:$0xf]
        %v1782 = vld [vmem:[#allocation10 + $0x74] sm:$0xf]
        %v1783 = vld [vmem:[#allocation10 + $0x78] sm:$0xf]
        %v1784 = vld [vmem:[#allocation10 + $0x7c] sm:$0xf]
        %v1785 = vld [vmem:[%s6] sm:$0x1]
        %v1787 = vperm.slane %v1785, 0
        %v1821 = vunpack.c.l.b16 %v1753
        %v1822 = vunpack.c.l.b16 %v1754
        %v1823 = vunpack.c.l.b16 %v1755
        %v1824 = vunpack.c.l.b16 %v1756
        %v1825 = vunpack.c.l.b16 %v1757
        %v1826 = vunpack.c.l.b16 %v1758
        %v1827 = vunpack.c.l.b16 %v1759
        %v1828 = vunpack.c.l.b16 %v1760
        %v1829 = vunpack.c.l.b16 %v1761
        %v1830 = vunpack.c.l.b16 %v1762
        %v1831 = vunpack.c.l.b16 %v1763
        %v1832 = vunpack.c.l.b16 %v1764
        %v1833 = vunpack.c.l.b16 %v1765
        %v1834 = vunpack.c.l.b16 %v1766
        %v1835 = vunpack.c.l.b16 %v1767
        %v1836 = vunpack.c.l.b16 %v1768
        %v1837 = vunpack.c.l.b16 %v1769
        %v1838 = vunpack.c.l.b16 %v1770
        %v1839 = vunpack.c.l.b16 %v1771
        %v1840 = vunpack.c.l.b16 %v1772
        %v1841 = vunpack.c.l.b16 %v1773
        %v1842 = vunpack.c.l.b16 %v1774
        %v1843 = vunpack.c.l.b16 %v1775
        %v1844 = vunpack.c.l.b16 %v1776
        %v1845 = vunpack.c.l.b16 %v1777
        %v1846 = vunpack.c.l.b16 %v1778
        %v1847 = vunpack.c.l.b16 %v1779
        %v1848 = vunpack.c.l.b16 %v1780
        %v1849 = vunpack.c.l.b16 %v1781
        %v1850 = vunpack.c.l.b16 %v1782
        %v1851 = vunpack.c.l.b16 %v1783
        %v1852 = vunpack.c.l.b16 %v1784
        %v1853 = vpack.c.b16 %v1822, %v1821
        %v1854 = vpack.c.b16 %v1824, %v1823
        %v1855 = vpack.c.b16 %v1826, %v1825
        %v1856 = vpack.c.b16 %v1828, %v1827
        %v1857 = vpack.c.b16 %v1830, %v1829
        %v1858 = vpack.c.b16 %v1832, %v1831
        %v1859 = vpack.c.b16 %v1834, %v1833
        %v1860 = vpack.c.b16 %v1836, %v1835
        %v1861 = vpack.c.b16 %v1838, %v1837
        %v1862 = vpack.c.b16 %v1840, %v1839
        %v1863 = vpack.c.b16 %v1842, %v1841
        %v1864 = vpack.c.b16 %v1844, %v1843
        %v1865 = vpack.c.b16 %v1846, %v1845
        %v1866 = vpack.c.b16 %v1848, %v1847
        %v1867 = vpack.c.b16 %v1850, %v1849
        %v1868 = vpack.c.b16 %v1852, %v1851
        %1885 = vmatpush.bf16.msra.mxu0 %v1860
        %1886 = vmatpush.bf16.msra.mxu0 %v1859
        %1887 = vmatpush.bf16.msra.mxu0 %v1858
        %1888 = vmatpush.bf16.msra.mxu0 %v1857
        %1889 = vmatpush.bf16.msra.mxu0 %v1856
        %1890 = vmatpush.bf16.msra.mxu0 %v1855
        %1891 = vmatpush.bf16.msra.mxu0 %v1854
        %1892 = vmatpush.bf16.msra.mxu0 %v1853
        %1893 = vmatmul.bf16.gmra.mxu0 %v1737
        %v1894 = vpop.f32.mrf.mxu0
        %v1895 = vadd.f32 %v1787, %v1894
        %v1896 = vpop.f32.mrf.mxu0
        %v1897 = vadd.f32 %v1787, %v1896
        %1898 = vmatmul.bf16.gmra.mxu0 %v1739
        %v1899 = vpop.f32.mrf.mxu0
        %v1900 = vadd.f32 %v1787, %v1899
        %v1901 = vpop.f32.mrf.mxu0
        %v1902 = vadd.f32 %v1787, %v1901
        %1903 = vmatmul.bf16.gmra.mxu0 %v1741
        %v1904 = vpop.f32.mrf.mxu0
        %v1905 = vadd.f32 %v1787, %v1904
        %v1906 = vpop.f32.mrf.mxu0
        %v1907 = vadd.f32 %v1787, %v1906
        %1908 = vmatmul.bf16.gmra.mxu0 %v1743
        %v1909 = vpop.f32.mrf.mxu0
        %v1910 = vadd.f32 %v1787, %v1909
        %v1911 = vpop.f32.mrf.mxu0
        %v1912 = vadd.f32 %v1787, %v1911
        %1913 = vmatmul.bf16.gmra.mxu0 %v1745
        %v1914 = vpop.f32.mrf.mxu0
        %v1915 = vadd.f32 %v1787, %v1914
        %v1916 = vpop.f32.mrf.mxu0
        %v1917 = vadd.f32 %v1787, %v1916
        %1918 = vmatmul.bf16.gmra.mxu0 %v1747
        %v1919 = vpop.f32.mrf.mxu0
        %v1920 = vadd.f32 %v1787, %v1919
        %v1921 = vpop.f32.mrf.mxu0
        %v1922 = vadd.f32 %v1787, %v1921
        %1923 = vmatmul.bf16.gmra.mxu0 %v1749
        %v1924 = vpop.f32.mrf.mxu0
        %v1925 = vadd.f32 %v1787, %v1924
        %v1926 = vpop.f32.mrf.mxu0
        %v1927 = vadd.f32 %v1787, %v1926
        %1928 = vmatmul.bf16.gmra.mxu0 %v1751
        %v1929 = vpop.f32.mrf.mxu0
        %v1930 = vadd.f32 %v1787, %v1929
        %v1931 = vpop.f32.mrf.mxu0
        %v1932 = vadd.f32 %v1787, %v1931
        %1933 = vdwg.mxu0
        %1934 = vmatpush.bf16.msra.mxu0 %v1868
        %1935 = vmatpush.bf16.msra.mxu0 %v1867
        %1936 = vmatpush.bf16.msra.mxu0 %v1866
        %1937 = vmatpush.bf16.msra.mxu0 %v1865
        %1938 = vmatpush.bf16.msra.mxu0 %v1864
        %1939 = vmatpush.bf16.msra.mxu0 %v1863
        %1940 = vmatpush.bf16.msra.mxu0 %v1862
        %1941 = vmatpush.bf16.msra.mxu0 %v1861
        %1942 = vmatmul.bf16.gmra.mxu0 %v1738
        %v1943 = vpop.f32.mrf.mxu0
        %v1944 = vadd.f32 %v1895, %v1943
        %v1945 = vpop.f32.mrf.mxu0
        %v1946 = vadd.f32 %v1897, %v1945
        %1947 = vmatmul.bf16.gmra.mxu0 %v1740
        %v1948 = vpop.f32.mrf.mxu0
        %v1949 = vadd.f32 %v1900, %v1948
        %v1950 = vpop.f32.mrf.mxu0
        %v1951 = vadd.f32 %v1902, %v1950
        %1952 = vmatmul.bf16.gmra.mxu0 %v1742
        %v1953 = vpop.f32.mrf.mxu0
        %v1954 = vadd.f32 %v1905, %v1953
        %v1955 = vpop.f32.mrf.mxu0
        %v1956 = vadd.f32 %v1907, %v1955
        %1957 = vmatmul.bf16.gmra.mxu0 %v1744
        %v1958 = vpop.f32.mrf.mxu0
        %v1959 = vadd.f32 %v1910, %v1958
        %v1960 = vpop.f32.mrf.mxu0
        %v1961 = vadd.f32 %v1912, %v1960
        %1962 = vmatmul.bf16.gmra.mxu0 %v1746
        %v1963 = vpop.f32.mrf.mxu0
        %v1964 = vadd.f32 %v1915, %v1963
        %v1965 = vpop.f32.mrf.mxu0
        %v1966 = vadd.f32 %v1917, %v1965
        %1967 = vmatmul.bf16.gmra.mxu0 %v1748
        %v1968 = vpop.f32.mrf.mxu0
        %v1969 = vadd.f32 %v1920, %v1968
        %v1970 = vpop.f32.mrf.mxu0
        %v1971 = vadd.f32 %v1922, %v1970
        %1972 = vmatmul.bf16.gmra.mxu0 %v1750
        %v1973 = vpop.f32.mrf.mxu0
        %v1974 = vadd.f32 %v1925, %v1973
        %v1975 = vpop.f32.mrf.mxu0
        %v1976 = vadd.f32 %v1927, %v1975
        %1977 = vmatmul.bf16.gmra.mxu0 %v1752
        %v1978 = vpop.f32.mrf.mxu0
        %v1979 = vadd.f32 %v1930, %v1978
        %v1980 = vpop.f32.mrf.mxu0
        %v1981 = vadd.f32 %v1932, %v1980
        %1982 = vdwg.mxu0
        %1983 = vst [vmem:[%s362] sm:$0xff] %v1944
        %1984 = vst [vmem:[%s362 + $0x8] sm:$0xff] %v1946
        %1985 = vst [vmem:[%s362 + $0x10] sm:$0xff] %v1949
        %1986 = vst [vmem:[%s362 + $0x18] sm:$0xff] %v1951
        %1987 = vst [vmem:[%s362 + $0x20] sm:$0xff] %v1954
        %1988 = vst [vmem:[%s362 + $0x28] sm:$0xff] %v1956
        %1989 = vst [vmem:[%s362 + $0x30] sm:$0xff] %v1959
        %1990 = vst [vmem:[%s362 + $0x38] sm:$0xff] %v1961
        %1991 = vst [vmem:[%s362 + $0x40] sm:$0xff] %v1964
        %1992 = vst [vmem:[%s362 + $0x48] sm:$0xff] %v1966
        %1993 = vst [vmem:[%s362 + $0x50] sm:$0xff] %v1969
        %1994 = vst [vmem:[%s362 + $0x58] sm:$0xff] %v1971
        %1995 = vst [vmem:[%s362 + $0x60] sm:$0xff] %v1974
        %1996 = vst [vmem:[%s362 + $0x68] sm:$0xff] %v1976
        %1997 = vst [vmem:[%s362 + $0x70] sm:$0xff] %v1979
        %1998 = vst [vmem:[%s362 + $0x78] sm:$0xff] %v1981
        %s1999 = sand.u32 %s186, 1
        %s2000 = scalar_lea.sflag [#allocation4], %s1999
        %s2001 = sand.u32 %s186, 1
        %s2002 = smul.addr %s2001, 128
        %s2003 = scalar_lea.vmem [#allocation11], %s2002
        // Predicated region
        $region69: #{tpu_custom_call.1} parent=47 // pred_check
          %p2004 = pneg %p196
        $region70: #{tpu_custom_call.1} parent=47 // pred_check_branch
          %2006 = sbr.rel (%p2004) target = $region72
        $region71: #{tpu_custom_call.1} parent=47 // pred_region
          %s2007 = smul.u32 16, %s26
          %2009 = vsyncadd %s2000, 0
          %s2010 = smul.addr %s2007, 8
          %s2011 = scalar_lea.hbm %s7, %s2010
          %s2012 = sshll.u32 %s2003, 4
          %s2013 = int_to_ptr.vmem [resolvable:$true] %s2012
          %s2014 = sshll.u32 %s2011, 4
          %s2015 = int_to_ptr.hbm [resolvable:$true] %s2014
          %2020 = dma.vmem_to_hbm [thread:$0]  %s2013, 2048, %s2015, %s2000, 128, 128, 8
        $region72: #{tpu_custom_call.1} parent=47 // pred_fallthru
          _
      $region48: #{tpu_custom_call.1} parent=5 // pred_fallthru
        _
      %p2021 = scmp.le.s32.totalorder 2, %s21
      // Predicated region
      $region73: #{tpu_custom_call.1} parent=5 // pred_check
        %p2022 = pneg %p2021
      $region74: #{tpu_custom_call.1} parent=5 // pred_check_branch
        %2024 = sbr.rel (%p2022) target = $region76
      $region75: #{tpu_custom_call.1} parent=5 // pred_region
        %s2025 = ssub.s32 %s21, 2
        // Predicated region
        $region77: #{tpu_custom_call.1} parent=75 // pred_check
          %p2026 = pneg %p202
        $region78: #{tpu_custom_call.1} parent=75 // pred_check_branch
          %2028 = sbr.rel (%p2026) target = $region80
        $region79: #{tpu_custom_call.1} parent=75 // pred_region
          %s2029 = sand.u32 %s187, 1
          %s2030 = scalar_lea.sflag [#allocation4], %s2029
          %s2031 = sand.u32 %s187, 1
          %s2032 = smul.addr %s2031, 128
          %s2033 = scalar_lea.vmem [#allocation11], %s2032
          %2035 = dma.done %s2030, 2048
        $region80: #{tpu_custom_call.1} parent=75 // pred_fallthru
          _
      $region76: #{tpu_custom_call.1} parent=5 // pred_fallthru
        _
    $region6: #{tpu_custom_call.1} parent=1 // loop_footer
      %s25 = sadd.s32 1, %s21
    $region7: #{tpu_custom_call.1} parent=1 // loop_footer_branch
      %20 = sbr.rel target = $region3
    $region8: #{tpu_custom_call.1} parent=1 // loop_exit
      _
    %2036 = vsyncpa [#allocation3], 1
    %s2037 = scalar_lea.sflag [#allocation3], 1
    %2038 = vsyncpa %s2037, 1
    %2039 = vsyncpa [#allocation6], 1
    %2040 = vsyncpa [#allocation9], 1
    %2041 = vsyncpa [#allocation4], 1
    %s2042 = scalar_lea.sflag [#allocation4], 1
    %2043 = vsyncpa %s2042, 1

</llo_original>
